<compile_context>
chip_gen: v5e
topology: v5e:2x2
jax: 0.10.0
libtpu: 0.0.40
codegen_flags: <defaults>
</compile_context>

<pallas_src>
import jax
import jax.numpy as jnp
from jax import lax
from jax.experimental import pallas as pl
from jax.experimental.pallas import tpu as pltpu

# ----------------------------- model config (small) -----------------------------
B = 2            # batch
S = 8            # sequence length
H = 32           # hidden size
NH = 2           # attention heads
DH = H // NH     # head dim
I = 64           # intermediate (FFN) size
V = 128          # vocab size
L = 2            # encoder layers
TYPE_VOCAB = 2
LABEL_IGNORE_ID = 0
LN_EPS = 1e-12
FOCAL_GAMMA = 2.0      # gamma=2 hard-coded as explicit squares in the kernel
FOCAL_ALPHA = 0.25
FOCAL_EPS = 1e-9
M = B * S
ATTN_SCALE = 1.0 / (DH ** 0.5)
LANES = 128

# ----------------------- packed operand layouts (static) -------------------------
# vec slab [N_VEC_ROWS, 128]: every 1-D parameter vector padded into one 128-lane row.
R_EMB_LN_G, R_EMB_LN_B = 0, 1
R_MLM_DENSE_B = 2
R_MLM_LN_G, R_MLM_LN_B = 3, 4
R_DEC_B = 5
R_DET_W = 6
R_DET_B = 7
R_LAYER0 = 8
ROWS_PER_LAYER = 8       # qkv_b, o_b, attn_ln_g, attn_ln_b, ff1_b, ff2_b, ffn_ln_g, ffn_ln_b
N_VEC_ROWS = R_LAYER0 + ROWS_PER_LAYER * L          # 24 rows (multiple of 8)

# tok slab [2M, 128]: rows 0..M-1 = one-hot MLM targets; rows M..2M-1 = aux lanes.
A_TOK_LAB = 0            # detection label per token
A_ACTIVE = 1             # attention_mask==1 per token
A_MASK0 = 8              # lanes 8..8+S-1: additive attention mask of this token's batch


# ------------------------------ in-kernel helpers --------------------------------
def _layernorm(x, g, b):
    mu = jnp.mean(x, axis=-1, keepdims=True)
    var = jnp.mean((x - mu) * (x - mu), axis=-1, keepdims=True)
    return (x - mu) * lax.rsqrt(var + LN_EPS) * g + b


def _gelu(x):
    # TODO(synk): BERT uses erf-GELU; tanh approximation kept (EUP-friendly, ~1e-4 delta).
    return 0.5 * x * (1.0 + jnp.tanh(0.7978845608028654 * (x + 0.044715 * x * x * x)))


def _full_spec(shape):
    """Whole-array VMEM block (grid=(1,))."""
    return pl.BlockSpec(shape, lambda i: (0,) * len(shape))


# ====================== THE fused forward kernel (grid=(1,)) =====================
def _fused_forward_kernel(emb_ref, tok_ref, vec_ref,
                          qkvw_ref, ow_ref, f1w_ref, f2w_ref,
                          mlmw_ref, wemb_ref,
                          logits_ref, sums_ref):
    vec = vec_ref[...]                                   # [24, 128] packed vectors
    tok = tok_ref[...]                                   # [2M, 128]
    onehot = tok[0:M, :]                                 # [M, V]
    aux = tok[M:2 * M, :]                                # [M, 128]
    tok_lab = aux[:, A_TOK_LAB:A_TOK_LAB + 1]            # [M, 1]
    active = aux[:, A_ACTIVE:A_ACTIVE + 1]               # [M, 1]

    # ---------------- embedding LayerNorm ----------------
    h = _layernorm(emb_ref[...],
                   vec[R_EMB_LN_G:R_EMB_LN_G + 1, 0:H],
                   vec[R_EMB_LN_B:R_EMB_LN_B + 1, 0:H])  # [M, H]

    # ---------------- encoder layers (static unroll over L) ----------------
    for l in range(L):
        base = R_LAYER0 + l * ROWS_PER_LAYER
        qkv_b = vec[base + 0:base + 1, 0:3 * H]
        o_b = vec[base + 1:base + 2, 0:H]
        ln1_g = vec[base + 2:base + 3, 0:H]
        ln1_b = vec[base + 3:base + 4, 0:H]
        ff1_b = vec[base + 4:base + 5, 0:I]
        ff2_b = vec[base + 5:base + 6, 0:H]
        ln2_g = vec[base + 6:base + 7, 0:H]
        ln2_b = vec[base + 7:base + 8, 0:H]

        # fused QKV projection: one [H, 3H] matmul
        qkv = jnp.dot(h, qkvw_ref[l], preferred_element_type=jnp.float32) + qkv_b
        q = qkv[:, 0:H] * ATTN_SCALE                     # fold 1/sqrt(DH) into q once
        k = qkv[:, H:2 * H]
        v = qkv[:, 2 * H:3 * H]

        # all (batch, head) pairs in-register; no ctx scratch, no kh.T transpose
        ctx_rows = []
        for b in range(B):
            r0, r1 = b * S, (b + 1) * S
            add_m = aux[r0:r0 + 1, A_MASK0:A_MASK0 + S]  # [1, S] additive key mask
            head_outs = []
            for hh in range(NH):
                c0, c1 = hh * DH, (hh + 1) * DH
                qh = q[r0:r1, c0:c1]                     # [S, DH]
                kh = k[r0:r1, c0:c1]
                vh = v[r0:r1, c0:c1]
                s = lax.dot_general(qh, kh, (((1,), (1,)), ((), ())),
                                    preferred_element_type=jnp.float32) + add_m  # [S, S]
                s = s - jnp.max(s, axis=-1, keepdims=True)
                p = jnp.exp(s)
                # approx reciprocal -> EUP slot, co-issues with VPU/MXU work
                p = p * pl.reciprocal(jnp.sum(p, axis=-1, keepdims=True), approx=True)
                head_outs.append(jnp.dot(p, vh, preferred_element_type=jnp.float32))
            ctx_rows.append(jnp.concatenate(head_outs, axis=1))   # [S, H]
        ctx = jnp.concatenate(ctx_rows, axis=0)                   # [M, H]

        attn_out = jnp.dot(ctx, ow_ref[l], preferred_element_type=jnp.float32) + o_b
        h1 = _layernorm(h + attn_out, ln1_g, ln1_b)

        ff = jnp.dot(h1, f1w_ref[l], preferred_element_type=jnp.float32) + ff1_b
        ff = _gelu(ff)
        ff = jnp.dot(ff, f2w_ref[l], preferred_element_type=jnp.float32) + ff2_b
        h = _layernorm(h1 + ff, ln2_g, ln2_b)

    # ---------------- MLM head: dense + gelu + LN + tied decoder ----------------
    t = jnp.dot(h, mlmw_ref[...], preferred_element_type=jnp.float32) \
        + vec[R_MLM_DENSE_B:R_MLM_DENSE_B + 1, 0:H]
    t = _gelu(t)
    t = _layernorm(t, vec[R_MLM_LN_G:R_MLM_LN_G + 1, 0:H],
                   vec[R_MLM_LN_B:R_MLM_LN_B + 1, 0:H])
    # tied decoder: t @ word_emb.T expressed as a last-dim contraction (no transpose)
    logits = lax.dot_general(t, wemb_ref[...], (((1,), (1,)), ((), ())),
                             preferred_element_type=jnp.float32) \
        + vec[R_DEC_B:R_DEC_B + 1, 0:V]                  # [M, V]  (lane-dense output)
    logits_ref[...] = logits

    # ---------------- MLM cross-entropy (ignored rows have all-zero one-hot) ----------------
    mx = jnp.max(logits, axis=-1, keepdims=True)
    lse = mx + jnp.log(jnp.sum(jnp.exp(logits - mx), axis=-1, keepdims=True))
    tgt = jnp.sum(logits * onehot, axis=-1, keepdims=True)
    valid = jnp.sum(onehot, axis=-1, keepdims=True)      # 1 iff label != -100
    sums_ref[0] = jnp.sum((lse - tgt) * valid)
    sums_ref[1] = jnp.sum(valid)

    # ---------------- detection head (N=1 linear as VPU mul + lane reduce) ----------------
    det_w = vec[R_DET_W:R_DET_W + 1, 0:H]                # [1, H]
    det_b = vec[R_DET_B:R_DET_B + 1, 0:1]                # [1, 1]
    det_logit = jnp.sum(h * det_w, axis=-1, keepdims=True) + det_b   # [M, 1]
    p = 1.0 / (1.0 + jnp.exp(-det_logit))
    # FocalLoss(activation_type='sigmoid'), gamma=2 (explicit squares), alpha=0.25, eps=1e-9
    pos = -FOCAL_ALPHA * tok_lab * (1.0 - p) * (1.0 - p) * jnp.log(p + FOCAL_EPS)
    neg = -(1.0 - FOCAL_ALPHA) * (1.0 - tok_lab) * p * p * jnp.log(1.0 - p + FOCAL_EPS)
    sums_ref[2] = jnp.sum((pos + neg) * active)
    sums_ref[3] = jnp.sum(active)


def fused_forward(emb, tok_slab, packed):
    return pl.pallas_call(
        _fused_forward_kernel,
        out_shape=(
            jax.ShapeDtypeStruct((M, V), jnp.float32),   # logits (lane-dense, V=128)
            jax.ShapeDtypeStruct((4,), jnp.float32),     # scalar loss sums in SMEM
        ),
        grid=(1,),
        in_specs=[
            _full_spec((M, H)),                          # summed embeddings (pre-LN)
            _full_spec((2 * M, LANES)),                  # tok slab: one-hot + aux lanes
            _full_spec((N_VEC_ROWS, LANES)),             # all 1-D params in one slab
            _full_spec((L, H, 3 * H)),                   # fused QKV weights (stacked)
            _full_spec((L, H, H)),                       # output-proj weights
            _full_spec((L, H, I)),                       # FFN-in weights
            _full_spec((L, I, H)),                       # FFN-out weights
            _full_spec((H, H)),                          # MLM dense weight
            _full_spec((V, H)),                          # word embedding (tied decoder)
        ],
        out_specs=(
            _full_spec((M, V)),
            pl.BlockSpec(memory_space=pltpu.MemorySpace.SMEM),
        ),
        compiler_params=pltpu.CompilerParams(dimension_semantics=("arbitrary",)),
    )(emb, tok_slab, packed["vec_slab"], packed["qkv_w"], packed["o_w"],
      packed["ff1_w"], packed["ff2_w"], packed["mlm_dense_w"], packed["word_emb"])


# ================================ params & packing ===============================
def init_params(key):
    keys = jax.random.split(key, 128)
    it = iter(range(128))

    def norm(shape):
        return jax.random.normal(keys[next(it)], shape, jnp.float32) * 0.02

    def zeros(shape):
        return jnp.zeros(shape, jnp.float32)

    def ones(shape):
        return jnp.ones(shape, jnp.float32)

    params = {
        "word_emb": norm((V, H)),
        "pos_emb": norm((S, H)),
        "type_emb": norm((TYPE_VOCAB, H)),
        "emb_ln_g": ones((H,)), "emb_ln_b": zeros((H,)),
        "layers": [],
        # MLM head (decoder weight tied to word_emb)
        "mlm_dense_w": norm((H, H)), "mlm_dense_b": zeros((H,)),
        "mlm_ln_g": ones((H,)), "mlm_ln_b": zeros((H,)),
        "mlm_decoder_b": zeros((V,)),
        # detection head
        "det_w": norm((H, 1)), "det_b": zeros((1,)),
    }
    for _ in range(L):
        params["layers"].append({
            "qkv_w": norm((H, 3 * H)), "qkv_b": zeros((3 * H,)),   # fused Q|K|V
            "o_w": norm((H, H)), "o_b": zeros((H,)),
            "attn_ln_g": ones((H,)), "attn_ln_b": zeros((H,)),
            "ff1_w": norm((H, I)), "ff1_b": zeros((I,)),
            "ff2_w": norm((I, H)), "ff2_b": zeros((H,)),
            "ffn_ln_g": ones((H,)), "ffn_ln_b": zeros((H,)),
        })
    return params


def _vec_row(v):
    v = jnp.asarray(v, jnp.float32).reshape(-1)
    return jnp.pad(v, (0, LANES - v.shape[0])).reshape(1, LANES)


def pack_params(params):
    """One-time packing: bias/LN vectors -> one [24,128] slab; layer matrices stacked."""
    rows = [
        _vec_row(params["emb_ln_g"]), _vec_row(params["emb_ln_b"]),
        _vec_row(params["mlm_dense_b"]),
        _vec_row(params["mlm_ln_g"]), _vec_row(params["mlm_ln_b"]),
        _vec_row(params["mlm_decoder_b"]),
        _vec_row(params["det_w"]), _vec_row(params["det_b"]),
    ]
    for lp in params["layers"]:
        rows += [_vec_row(lp["qkv_b"]), _vec_row(lp["o_b"]),
                 _vec_row(lp["attn_ln_g"]), _vec_row(lp["attn_ln_b"]),
                 _vec_row(lp["ff1_b"]), _vec_row(lp["ff2_b"]),
                 _vec_row(lp["ffn_ln_g"]), _vec_row(lp["ffn_ln_b"])]
    vec_slab = jnp.concatenate(rows, axis=0)             # [24, 128]
    assert vec_slab.shape == (N_VEC_ROWS, LANES)
    return {
        "vec_slab": vec_slab,
        "qkv_w": jnp.stack([lp["qkv_w"] for lp in params["layers"]]),
        "o_w": jnp.stack([lp["o_w"] for lp in params["layers"]]),
        "ff1_w": jnp.stack([lp["ff1_w"] for lp in params["layers"]]),
        "ff2_w": jnp.stack([lp["ff2_w"] for lp in params["layers"]]),
        "mlm_dense_w": params["mlm_dense_w"],
        "word_emb": params["word_emb"],
        "pos_emb": params["pos_emb"],
        "type_emb": params["type_emb"],
    }


# ================================ model (glue) ===================================
def bert_mlm_detect_forward(packed, input_ids, attention_mask, token_type_ids,
                            trg_ids, token_labels):
    # --- trg_ids[trg_ids == label_ignore_id] = -100 ---
    trg = jnp.where(trg_ids == LABEL_IGNORE_ID, -100, trg_ids).astype(jnp.int32)

    # --- embeddings (gathers are glue; LN happens in the fused kernel) ---
    pos_ids = jnp.arange(S, dtype=jnp.int32)
    emb = (jnp.take(packed["word_emb"], input_ids, axis=0)
           + packed["pos_emb"][pos_ids][None, :, :]
           + jnp.take(packed["type_emb"], token_type_ids, axis=0)).reshape(M, H)

    # --- per-token aux lanes + one-hot targets packed into one lane-dense slab ---
    add_mask = (1.0 - attention_mask.astype(jnp.float32)) * -10000.0      # [B, S]
    onehot = jax.nn.one_hot(trg.reshape(M), V, dtype=jnp.float32)         # -100 -> zero row
    aux = jnp.zeros((M, LANES), jnp.float32)
    aux = aux.at[:, A_TOK_LAB].set(token_labels.astype(jnp.float32).reshape(M))
    aux = aux.at[:, A_ACTIVE].set((attention_mask == 1).astype(jnp.float32).reshape(M))
    aux = aux.at[:, A_MASK0:A_MASK0 + S].set(jnp.repeat(add_mask, S, axis=0))
    tok_slab = jnp.concatenate([onehot, aux], axis=0)                     # [2M, 128]

    logits2d, sums = fused_forward(emb, tok_slab, packed)
    logits = logits2d.reshape(B, S, V)

    mlm_loss = sums[0] / jnp.maximum(sums[1], 1.0)
    det_loss = sums[2] / jnp.maximum(sums[3], 1.0)
    return mlm_loss + det_loss, logits


# ==================================== main =======================================
if __name__ == "__main__":
    key = jax.random.PRNGKey(0)
    k_par, k_ids, k_lab = jax.random.split(key, 3)

    params = init_params(k_par)
    packed = pack_params(params)

    input_ids = jax.random.randint(k_ids, (B, S), 1, V, dtype=jnp.int32)
    attention_mask = jnp.array(
        [[1, 1, 1, 1, 1, 1, 0, 0],
         [1, 1, 1, 1, 1, 1, 1, 1]], dtype=jnp.int32)
    token_type_ids = jnp.zeros((B, S), dtype=jnp.int32)
    # padded positions carry the label_ignore_id (-> -100 inside the forward)
    trg_ids = jnp.where(attention_mask == 0, LABEL_IGNORE_ID, input_ids).astype(jnp.int32)
    token_labels = jax.random.bernoulli(k_lab, 0.3, (B, S)).astype(jnp.float32)

    fwd = jax.jit(bert_mlm_detect_forward)
    loss, logits = fwd(packed, input_ids, attention_mask, token_type_ids,
                       trg_ids, token_labels)
    jax.block_until_ready((loss, logits))

    assert logits.shape == (B, S, V)
    assert jnp.isfinite(loss)
    print("KERNEL_OK")
</pallas_src>

<mosaic_0001>
module attributes {stable_mosaic.version = 11 : i64} {
  func.func @_fused_forward_kernel(%arg0: i32, %arg1: memref<16x32xf32, #tpu.memory_space<vmem>>, %arg2: memref<32x128xf32, #tpu.memory_space<vmem>>, %arg3: memref<24x128xf32, #tpu.memory_space<vmem>>, %arg4: memref<2x32x96xf32, #tpu.memory_space<vmem>>, %arg5: memref<2x32x32xf32, #tpu.memory_space<vmem>>, %arg6: memref<2x32x64xf32, #tpu.memory_space<vmem>>, %arg7: memref<2x64x32xf32, #tpu.memory_space<vmem>>, %arg8: memref<32x32xf32, #tpu.memory_space<vmem>>, %arg9: memref<128x32xf32, #tpu.memory_space<vmem>>, %arg10: memref<16x128xf32, #tpu.memory_space<vmem>>, %arg11: memref<4xf32, #tpu.memory_space<smem>>) attributes {dimension_semantics = [#tpu.dimension_semantics<arbitrary>], iteration_bounds = array<i64: 1>, scalar_prefetch = 0 : i64, scratch_operands = 0 : i64, tpu.core_type = #tpu.core_type<tc>, window_params = [{pipeline_mode = #tpu.pipeline_mode<synchronous>, transform_indices = @transform_0, window_bounds = array<i64: 16, 32>}, {pipeline_mode = #tpu.pipeline_mode<synchronous>, transform_indices = @transform_1, window_bounds = array<i64: 32, 128>}, {pipeline_mode = #tpu.pipeline_mode<synchronous>, transform_indices = @transform_2, window_bounds = array<i64: 24, 128>}, {pipeline_mode = #tpu.pipeline_mode<synchronous>, transform_indices = @transform_3, window_bounds = array<i64: 2, 32, 96>}, {pipeline_mode = #tpu.pipeline_mode<synchronous>, transform_indices = @transform_4, window_bounds = array<i64: 2, 32, 32>}, {pipeline_mode = #tpu.pipeline_mode<synchronous>, transform_indices = @transform_5, window_bounds = array<i64: 2, 32, 64>}, {pipeline_mode = #tpu.pipeline_mode<synchronous>, transform_indices = @transform_6, window_bounds = array<i64: 2, 64, 32>}, {pipeline_mode = #tpu.pipeline_mode<synchronous>, transform_indices = @transform_7, window_bounds = array<i64: 32, 32>}, {pipeline_mode = #tpu.pipeline_mode<synchronous>, transform_indices = @transform_8, window_bounds = array<i64: 128, 32>}, {pipeline_mode = #tpu.pipeline_mode<synchronous>, transform_indices = @transform_9, window_bounds = array<i64: 16, 128>}, {transform_indices = @transform_10, window_bounds = array<i64: 4>}]} {
    %c0 = arith.constant 0 : index
    %c0_0 = arith.constant 0 : index
    %0 = vector.load %arg3[%c0, %c0_0] : memref<24x128xf32, #tpu.memory_space<vmem>>, vector<24x128xf32>
    %c0_1 = arith.constant 0 : index
    %c0_2 = arith.constant 0 : index
    %1 = vector.load %arg2[%c0_1, %c0_2] : memref<32x128xf32, #tpu.memory_space<vmem>>, vector<32x128xf32>
    %2 = vector.extract_strided_slice %1 {offsets = [0, 0], sizes = [16, 128], strides = [1, 1]} : vector<32x128xf32> to vector<16x128xf32>
    %3 = vector.extract_strided_slice %1 {offsets = [16, 0], sizes = [16, 128], strides = [1, 1]} : vector<32x128xf32> to vector<16x128xf32>
    %4 = vector.extract_strided_slice %3 {offsets = [0, 0], sizes = [16, 1], strides = [1, 1]} : vector<16x128xf32> to vector<16x1xf32>
    %5 = vector.extract_strided_slice %3 {offsets = [0, 1], sizes = [16, 1], strides = [1, 1]} : vector<16x128xf32> to vector<16x1xf32>
    %c0_3 = arith.constant 0 : index
    %c0_4 = arith.constant 0 : index
    %6 = vector.load %arg1[%c0_3, %c0_4] : memref<16x32xf32, #tpu.memory_space<vmem>>, vector<16x32xf32>
    %7 = vector.extract_strided_slice %0 {offsets = [0, 0], sizes = [1, 32], strides = [1, 1]} : vector<24x128xf32> to vector<1x32xf32>
    %8 = vector.extract_strided_slice %0 {offsets = [1, 0], sizes = [1, 32], strides = [1, 1]} : vector<24x128xf32> to vector<1x32xf32>
    %cst = arith.constant dense<0.000000e+00> : vector<16xf32>
    %9 = vector.multi_reduction <add>, %6, %cst [1] : vector<16x32xf32> to vector<16xf32>
    %10 = vector.shape_cast %9 : vector<16xf32> to vector<16x1xf32>
    %cst_5 = arith.constant 3.200000e+01 : f32
    %11 = vector.broadcast %cst_5 : f32 to vector<16x1xf32>
    %12 = arith.divf %10, %11 : vector<16x1xf32>
    %13 = vector.broadcast %12 : vector<16x1xf32> to vector<16x32xf32>
    %14 = arith.subf %6, %13 : vector<16x32xf32>
    %15 = vector.broadcast %12 : vector<16x1xf32> to vector<16x32xf32>
    %16 = arith.subf %6, %15 : vector<16x32xf32>
    %17 = arith.mulf %14, %16 : vector<16x32xf32>
    %cst_6 = arith.constant dense<0.000000e+00> : vector<16xf32>
    %18 = vector.multi_reduction <add>, %17, %cst_6 [1] : vector<16x32xf32> to vector<16xf32>
    %19 = vector.shape_cast %18 : vector<16xf32> to vector<16x1xf32>
    %cst_7 = arith.constant 3.200000e+01 : f32
    %20 = vector.broadcast %cst_7 : f32 to vector<16x1xf32>
    %21 = arith.divf %19, %20 : vector<16x1xf32>
    %22 = vector.broadcast %12 : vector<16x1xf32> to vector<16x32xf32>
    %23 = arith.subf %6, %22 : vector<16x32xf32>
    %cst_8 = arith.constant 9.99999996E-13 : f32
    %24 = vector.broadcast %cst_8 : f32 to vector<16x1xf32>
    %25 = arith.addf %21, %24 : vector<16x1xf32>
    %26 = math.rsqrt %25 : vector<16x1xf32>
    %27 = vector.broadcast %26 : vector<16x1xf32> to vector<16x32xf32>
    %28 = arith.mulf %23, %27 : vector<16x32xf32>
    %29 = vector.broadcast %7 : vector<1x32xf32> to vector<16x32xf32>
    %30 = arith.mulf %28, %29 : vector<16x32xf32>
    %31 = vector.broadcast %8 : vector<1x32xf32> to vector<16x32xf32>
    %32 = arith.addf %30, %31 : vector<16x32xf32>
    %33 = vector.extract_strided_slice %0 {offsets = [8, 0], sizes = [1, 96], strides = [1, 1]} : vector<24x128xf32> to vector<1x96xf32>
    %34 = vector.extract_strided_slice %0 {offsets = [9, 0], sizes = [1, 32], strides = [1, 1]} : vector<24x128xf32> to vector<1x32xf32>
    %35 = vector.extract_strided_slice %0 {offsets = [10, 0], sizes = [1, 32], strides = [1, 1]} : vector<24x128xf32> to vector<1x32xf32>
    %36 = vector.extract_strided_slice %0 {offsets = [11, 0], sizes = [1, 32], strides = [1, 1]} : vector<24x128xf32> to vector<1x32xf32>
    %37 = vector.extract_strided_slice %0 {offsets = [12, 0], sizes = [1, 64], strides = [1, 1]} : vector<24x128xf32> to vector<1x64xf32>
    %38 = vector.extract_strided_slice %0 {offsets = [13, 0], sizes = [1, 32], strides = [1, 1]} : vector<24x128xf32> to vector<1x32xf32>
    %39 = vector.extract_strided_slice %0 {offsets = [14, 0], sizes = [1, 32], strides = [1, 1]} : vector<24x128xf32> to vector<1x32xf32>
    %40 = vector.extract_strided_slice %0 {offsets = [15, 0], sizes = [1, 32], strides = [1, 1]} : vector<24x128xf32> to vector<1x32xf32>
    %c0_9 = arith.constant 0 : index
    %c0_10 = arith.constant 0 : index
    %c0_11 = arith.constant 0 : index
    %41 = vector.load %arg4[%c0_9, %c0_10, %c0_11] : memref<2x32x96xf32, #tpu.memory_space<vmem>>, vector<1x32x96xf32>
    %42 = vector.shape_cast %41 : vector<1x32x96xf32> to vector<32x96xf32>
    %cst_12 = arith.constant dense<0.000000e+00> : vector<16x96xf32>
    %43 = tpu.matmul %32, %42, %cst_12 {dimension_numbers = #tpu.dot_dimension_numbers<[1], [0], [0], [1], [0, 0, 1, 1], [], []>} : vector<16x32xf32>, vector<32x96xf32>, vector<16x96xf32> -> vector<16x96xf32>
    %44 = vector.broadcast %33 : vector<1x96xf32> to vector<16x96xf32>
    %45 = arith.addf %43, %44 : vector<16x96xf32>
    %46 = vector.extract_strided_slice %45 {offsets = [0, 0], sizes = [16, 32], strides = [1, 1]} : vector<16x96xf32> to vector<16x32xf32>
    %cst_13 = arith.constant 2.500000e-01 : f32
    %47 = vector.broadcast %cst_13 : f32 to vector<16x32xf32>
    %48 = arith.mulf %46, %47 : vector<16x32xf32>
    %49 = vector.extract_strided_slice %45 {offsets = [0, 32], sizes = [16, 32], strides = [1, 1]} : vector<16x96xf32> to vector<16x32xf32>
    %50 = vector.extract_strided_slice %45 {offsets = [0, 64], sizes = [16, 32], strides = [1, 1]} : vector<16x96xf32> to vector<16x32xf32>
    %51 = vector.extract_strided_slice %3 {offsets = [0, 8], sizes = [1, 8], strides = [1, 1]} : vector<16x128xf32> to vector<1x8xf32>
    %52 = vector.extract_strided_slice %48 {offsets = [0, 0], sizes = [8, 16], strides = [1, 1]} : vector<16x32xf32> to vector<8x16xf32>
    %53 = vector.extract_strided_slice %49 {offsets = [0, 0], sizes = [8, 16], strides = [1, 1]} : vector<16x32xf32> to vector<8x16xf32>
    %54 = vector.extract_strided_slice %50 {offsets = [0, 0], sizes = [8, 16], strides = [1, 1]} : vector<16x32xf32> to vector<8x16xf32>
    %cst_14 = arith.constant dense<0.000000e+00> : vector<8x8xf32>
    %55 = tpu.matmul %52, %53, %cst_14 {dimension_numbers = #tpu.dot_dimension_numbers<[1], [1], [0], [0], [0, 0, 1, 0], [], []>} : vector<8x16xf32>, vector<8x16xf32>, vector<8x8xf32> -> vector<8x8xf32>
    %56 = vector.broadcast %51 : vector<1x8xf32> to vector<8x8xf32>
    %57 = arith.addf %55, %56 : vector<8x8xf32>
    %cst_15 = arith.constant dense<0xFF800000> : vector<8xf32>
    %58 = vector.multi_reduction <maximumf>, %57, %cst_15 [1] : vector<8x8xf32> to vector<8xf32>
    %59 = vector.shape_cast %58 : vector<8xf32> to vector<8x1xf32>
    %60 = vector.broadcast %59 : vector<8x1xf32> to vector<8x8xf32>
    %61 = arith.subf %57, %60 : vector<8x8xf32>
    %62 = math.exp %61 : vector<8x8xf32>
    %cst_16 = arith.constant dense<0.000000e+00> : vector<8xf32>
    %63 = vector.multi_reduction <add>, %62, %cst_16 [1] : vector<8x8xf32> to vector<8xf32>
    %64 = vector.shape_cast %63 : vector<8xf32> to vector<8x1xf32>
    %65 = tpu.reciprocal %64 {approx = true} : vector<8x1xf32> -> vector<8x1xf32>
    %66 = vector.broadcast %65 : vector<8x1xf32> to vector<8x8xf32>
    %67 = arith.mulf %62, %66 : vector<8x8xf32>
    %cst_17 = arith.constant dense<0.000000e+00> : vector<8x16xf32>
    %68 = tpu.matmul %67, %54, %cst_17 {dimension_numbers = #tpu.dot_dimension_numbers<[1], [0], [0], [1], [0, 0, 1, 1], [], []>} : vector<8x8xf32>, vector<8x16xf32>, vector<8x16xf32> -> vector<8x16xf32>
    %69 = vector.extract_strided_slice %48 {offsets = [0, 16], sizes = [8, 16], strides = [1, 1]} : vector<16x32xf32> to vector<8x16xf32>
    %70 = vector.extract_strided_slice %49 {offsets = [0, 16], sizes = [8, 16], strides = [1, 1]} : vector<16x32xf32> to vector<8x16xf32>
    %71 = vector.extract_strided_slice %50 {offsets = [0, 16], sizes = [8, 16], strides = [1, 1]} : vector<16x32xf32> to vector<8x16xf32>
    %cst_18 = arith.constant dense<0.000000e+00> : vector<8x8xf32>
    %72 = tpu.matmul %69, %70, %cst_18 {dimension_numbers = #tpu.dot_dimension_numbers<[1], [1], [0], [0], [0, 0, 1, 0], [], []>} : vector<8x16xf32>, vector<8x16xf32>, vector<8x8xf32> -> vector<8x8xf32>
    %73 = vector.broadcast %51 : vector<1x8xf32> to vector<8x8xf32>
    %74 = arith.addf %72, %73 : vector<8x8xf32>
    %cst_19 = arith.constant dense<0xFF800000> : vector<8xf32>
    %75 = vector.multi_reduction <maximumf>, %74, %cst_19 [1] : vector<8x8xf32> to vector<8xf32>
    %76 = vector.shape_cast %75 : vector<8xf32> to vector<8x1xf32>
    %77 = vector.broadcast %76 : vector<8x1xf32> to vector<8x8xf32>
    %78 = arith.subf %74, %77 : vector<8x8xf32>
    %79 = math.exp %78 : vector<8x8xf32>
    %cst_20 = arith.constant dense<0.000000e+00> : vector<8xf32>
    %80 = vector.multi_reduction <add>, %79, %cst_20 [1] : vector<8x8xf32> to vector<8xf32>
    %81 = vector.shape_cast %80 : vector<8xf32> to vector<8x1xf32>
    %82 = tpu.reciprocal %81 {approx = true} : vector<8x1xf32> -> vector<8x1xf32>
    %83 = vector.broadcast %82 : vector<8x1xf32> to vector<8x8xf32>
    %84 = arith.mulf %79, %83 : vector<8x8xf32>
    %cst_21 = arith.constant dense<0.000000e+00> : vector<8x16xf32>
    %85 = tpu.matmul %84, %71, %cst_21 {dimension_numbers = #tpu.dot_dimension_numbers<[1], [0], [0], [1], [0, 0, 1, 1], [], []>} : vector<8x8xf32>, vector<8x16xf32>, vector<8x16xf32> -> vector<8x16xf32>
    %86 = tpu.concatenate %68, %85 in 1 : vector<8x16xf32>, vector<8x16xf32> -> vector<8x32xf32>
    %87 = vector.extract_strided_slice %3 {offsets = [8, 8], sizes = [1, 8], strides = [1, 1]} : vector<16x128xf32> to vector<1x8xf32>
    %88 = vector.extract_strided_slice %48 {offsets = [8, 0], sizes = [8, 16], strides = [1, 1]} : vector<16x32xf32> to vector<8x16xf32>
    %89 = vector.extract_strided_slice %49 {offsets = [8, 0], sizes = [8, 16], strides = [1, 1]} : vector<16x32xf32> to vector<8x16xf32>
    %90 = vector.extract_strided_slice %50 {offsets = [8, 0], sizes = [8, 16], strides = [1, 1]} : vector<16x32xf32> to vector<8x16xf32>
    %cst_22 = arith.constant dense<0.000000e+00> : vector<8x8xf32>
    %91 = tpu.matmul %88, %89, %cst_22 {dimension_numbers = #tpu.dot_dimension_numbers<[1], [1], [0], [0], [0, 0, 1, 0], [], []>} : vector<8x16xf32>, vector<8x16xf32>, vector<8x8xf32> -> vector<8x8xf32>
    %92 = vector.broadcast %87 : vector<1x8xf32> to vector<8x8xf32>
    %93 = arith.addf %91, %92 : vector<8x8xf32>
    %cst_23 = arith.constant dense<0xFF800000> : vector<8xf32>
    %94 = vector.multi_reduction <maximumf>, %93, %cst_23 [1] : vector<8x8xf32> to vector<8xf32>
    %95 = vector.shape_cast %94 : vector<8xf32> to vector<8x1xf32>
    %96 = vector.broadcast %95 : vector<8x1xf32> to vector<8x8xf32>
    %97 = arith.subf %93, %96 : vector<8x8xf32>
    %98 = math.exp %97 : vector<8x8xf32>
    %cst_24 = arith.constant dense<0.000000e+00> : vector<8xf32>
    %99 = vector.multi_reduction <add>, %98, %cst_24 [1] : vector<8x8xf32> to vector<8xf32>
    %100 = vector.shape_cast %99 : vector<8xf32> to vector<8x1xf32>
    %101 = tpu.reciprocal %100 {approx = true} : vector<8x1xf32> -> vector<8x1xf32>
    %102 = vector.broadcast %101 : vector<8x1xf32> to vector<8x8xf32>
    %103 = arith.mulf %98, %102 : vector<8x8xf32>
    %cst_25 = arith.constant dense<0.000000e+00> : vector<8x16xf32>
    %104 = tpu.matmul %103, %90, %cst_25 {dimension_numbers = #tpu.dot_dimension_numbers<[1], [0], [0], [1], [0, 0, 1, 1], [], []>} : vector<8x8xf32>, vector<8x16xf32>, vector<8x16xf32> -> vector<8x16xf32>
    %105 = vector.extract_strided_slice %48 {offsets = [8, 16], sizes = [8, 16], strides = [1, 1]} : vector<16x32xf32> to vector<8x16xf32>
    %106 = vector.extract_strided_slice %49 {offsets = [8, 16], sizes = [8, 16], strides = [1, 1]} : vector<16x32xf32> to vector<8x16xf32>
    %107 = vector.extract_strided_slice %50 {offsets = [8, 16], sizes = [8, 16], strides = [1, 1]} : vector<16x32xf32> to vector<8x16xf32>
    %cst_26 = arith.constant dense<0.000000e+00> : vector<8x8xf32>
    %108 = tpu.matmul %105, %106, %cst_26 {dimension_numbers = #tpu.dot_dimension_numbers<[1], [1], [0], [0], [0, 0, 1, 0], [], []>} : vector<8x16xf32>, vector<8x16xf32>, vector<8x8xf32> -> vector<8x8xf32>
    %109 = vector.broadcast %87 : vector<1x8xf32> to vector<8x8xf32>
    %110 = arith.addf %108, %109 : vector<8x8xf32>
    %cst_27 = arith.constant dense<0xFF800000> : vector<8xf32>
    %111 = vector.multi_reduction <maximumf>, %110, %cst_27 [1] : vector<8x8xf32> to vector<8xf32>
    %112 = vector.shape_cast %111 : vector<8xf32> to vector<8x1xf32>
    %113 = vector.broadcast %112 : vector<8x1xf32> to vector<8x8xf32>
    %114 = arith.subf %110, %113 : vector<8x8xf32>
    %115 = math.exp %114 : vector<8x8xf32>
    %cst_28 = arith.constant dense<0.000000e+00> : vector<8xf32>
    %116 = vector.multi_reduction <add>, %115, %cst_28 [1] : vector<8x8xf32> to vector<8xf32>
    %117 = vector.shape_cast %116 : vector<8xf32> to vector<8x1xf32>
    %118 = tpu.reciprocal %117 {approx = true} : vector<8x1xf32> -> vector<8x1xf32>
    %119 = vector.broadcast %118 : vector<8x1xf32> to vector<8x8xf32>
    %120 = arith.mulf %115, %119 : vector<8x8xf32>
    %cst_29 = arith.constant dense<0.000000e+00> : vector<8x16xf32>
    %121 = tpu.matmul %120, %107, %cst_29 {dimension_numbers = #tpu.dot_dimension_numbers<[1], [0], [0], [1], [0, 0, 1, 1], [], []>} : vector<8x8xf32>, vector<8x16xf32>, vector<8x16xf32> -> vector<8x16xf32>
    %122 = tpu.concatenate %104, %121 in 1 : vector<8x16xf32>, vector<8x16xf32> -> vector<8x32xf32>
    %123 = tpu.concatenate %86, %122 in 0 : vector<8x32xf32>, vector<8x32xf32> -> vector<16x32xf32>
    %c0_30 = arith.constant 0 : index
    %c0_31 = arith.constant 0 : index
    %c0_32 = arith.constant 0 : index
    %124 = vector.load %arg5[%c0_30, %c0_31, %c0_32] : memref<2x32x32xf32, #tpu.memory_space<vmem>>, vector<1x32x32xf32>
    %125 = vector.shape_cast %124 : vector<1x32x32xf32> to vector<32x32xf32>
    %cst_33 = arith.constant dense<0.000000e+00> : vector<16x32xf32>
    %126 = tpu.matmul %123, %125, %cst_33 {dimension_numbers = #tpu.dot_dimension_numbers<[1], [0], [0], [1], [0, 0, 1, 1], [], []>} : vector<16x32xf32>, vector<32x32xf32>, vector<16x32xf32> -> vector<16x32xf32>
    %127 = vector.broadcast %34 : vector<1x32xf32> to vector<16x32xf32>
    %128 = arith.addf %126, %127 : vector<16x32xf32>
    %129 = arith.addf %32, %128 : vector<16x32xf32>
    %cst_34 = arith.constant dense<0.000000e+00> : vector<16xf32>
    %130 = vector.multi_reduction <add>, %129, %cst_34 [1] : vector<16x32xf32> to vector<16xf32>
    %131 = vector.shape_cast %130 : vector<16xf32> to vector<16x1xf32>
    %cst_35 = arith.constant 3.200000e+01 : f32
    %132 = vector.broadcast %cst_35 : f32 to vector<16x1xf32>
    %133 = arith.divf %131, %132 : vector<16x1xf32>
    %134 = vector.broadcast %133 : vector<16x1xf32> to vector<16x32xf32>
    %135 = arith.subf %129, %134 : vector<16x32xf32>
    %136 = vector.broadcast %133 : vector<16x1xf32> to vector<16x32xf32>
    %137 = arith.subf %129, %136 : vector<16x32xf32>
    %138 = arith.mulf %135, %137 : vector<16x32xf32>
    %cst_36 = arith.constant dense<0.000000e+00> : vector<16xf32>
    %139 = vector.multi_reduction <add>, %138, %cst_36 [1] : vector<16x32xf32> to vector<16xf32>
    %140 = vector.shape_cast %139 : vector<16xf32> to vector<16x1xf32>
    %cst_37 = arith.constant 3.200000e+01 : f32
    %141 = vector.broadcast %cst_37 : f32 to vector<16x1xf32>
    %142 = arith.divf %140, %141 : vector<16x1xf32>
    %143 = vector.broadcast %133 : vector<16x1xf32> to vector<16x32xf32>
    %144 = arith.subf %129, %143 : vector<16x32xf32>
    %cst_38 = arith.constant 9.99999996E-13 : f32
    %145 = vector.broadcast %cst_38 : f32 to vector<16x1xf32>
    %146 = arith.addf %142, %145 : vector<16x1xf32>
    %147 = math.rsqrt %146 : vector<16x1xf32>
    %148 = vector.broadcast %147 : vector<16x1xf32> to vector<16x32xf32>
    %149 = arith.mulf %144, %148 : vector<16x32xf32>
    %150 = vector.broadcast %35 : vector<1x32xf32> to vector<16x32xf32>
    %151 = arith.mulf %149, %150 : vector<16x32xf32>
    %152 = vector.broadcast %36 : vector<1x32xf32> to vector<16x32xf32>
    %153 = arith.addf %151, %152 : vector<16x32xf32>
    %c0_39 = arith.constant 0 : index
    %c0_40 = arith.constant 0 : index
    %c0_41 = arith.constant 0 : index
    %154 = vector.load %arg6[%c0_39, %c0_40, %c0_41] : memref<2x32x64xf32, #tpu.memory_space<vmem>>, vector<1x32x64xf32>
    %155 = vector.shape_cast %154 : vector<1x32x64xf32> to vector<32x64xf32>
    %cst_42 = arith.constant dense<0.000000e+00> : vector<16x64xf32>
    %156 = tpu.matmul %153, %155, %cst_42 {dimension_numbers = #tpu.dot_dimension_numbers<[1], [0], [0], [1], [0, 0, 1, 1], [], []>} : vector<16x32xf32>, vector<32x64xf32>, vector<16x64xf32> -> vector<16x64xf32>
    %157 = vector.broadcast %37 : vector<1x64xf32> to vector<16x64xf32>
    %158 = arith.addf %156, %157 : vector<16x64xf32>
    %cst_43 = arith.constant 5.000000e-01 : f32
    %159 = vector.broadcast %cst_43 : f32 to vector<16x64xf32>
    %160 = arith.mulf %159, %158 : vector<16x64xf32>
    %cst_44 = arith.constant 4.471500e-02 : f32
    %161 = vector.broadcast %cst_44 : f32 to vector<16x64xf32>
    %162 = arith.mulf %161, %158 : vector<16x64xf32>
    %163 = arith.mulf %162, %158 : vector<16x64xf32>
    %164 = arith.mulf %163, %158 : vector<16x64xf32>
    %165 = arith.addf %158, %164 : vector<16x64xf32>
    %cst_45 = arith.constant 0.797884583 : f32
    %166 = vector.broadcast %cst_45 : f32 to vector<16x64xf32>
    %167 = arith.mulf %166, %165 : vector<16x64xf32>
    %168 = math.tanh %167 : vector<16x64xf32>
    %cst_46 = arith.constant 1.000000e+00 : f32
    %169 = vector.broadcast %cst_46 : f32 to vector<16x64xf32>
    %170 = arith.addf %169, %168 : vector<16x64xf32>
    %171 = arith.mulf %160, %170 : vector<16x64xf32>
    %c0_47 = arith.constant 0 : index
    %c0_48 = arith.constant 0 : index
    %c0_49 = arith.constant 0 : index
    %172 = vector.load %arg7[%c0_47, %c0_48, %c0_49] : memref<2x64x32xf32, #tpu.memory_space<vmem>>, vector<1x64x32xf32>
    %173 = vector.shape_cast %172 : vector<1x64x32xf32> to vector<64x32xf32>
    %cst_50 = arith.constant dense<0.000000e+00> : vector<16x32xf32>
    %174 = tpu.matmul %171, %173, %cst_50 {dimension_numbers = #tpu.dot_dimension_numbers<[1], [0], [0], [1], [0, 0, 1, 1], [], []>} : vector<16x64xf32>, vector<64x32xf32>, vector<16x32xf32> -> vector<16x32xf32>
    %175 = vector.broadcast %38 : vector<1x32xf32> to vector<16x32xf32>
    %176 = arith.addf %174, %175 : vector<16x32xf32>
    %177 = arith.addf %153, %176 : vector<16x32xf32>
    %cst_51 = arith.constant dense<0.000000e+00> : vector<16xf32>
    %178 = vector.multi_reduction <add>, %177, %cst_51 [1] : vector<16x32xf32> to vector<16xf32>
    %179 = vector.shape_cast %178 : vector<16xf32> to vector<16x1xf32>
    %cst_52 = arith.constant 3.200000e+01 : f32
    %180 = vector.broadcast %cst_52 : f32 to vector<16x1xf32>
    %181 = arith.divf %179, %180 : vector<16x1xf32>
    %182 = vector.broadcast %181 : vector<16x1xf32> to vector<16x32xf32>
    %183 = arith.subf %177, %182 : vector<16x32xf32>
    %184 = vector.broadcast %181 : vector<16x1xf32> to vector<16x32xf32>
    %185 = arith.subf %177, %184 : vector<16x32xf32>
    %186 = arith.mulf %183, %185 : vector<16x32xf32>
    %cst_53 = arith.constant dense<0.000000e+00> : vector<16xf32>
    %187 = vector.multi_reduction <add>, %186, %cst_53 [1] : vector<16x32xf32> to vector<16xf32>
    %188 = vector.shape_cast %187 : vector<16xf32> to vector<16x1xf32>
    %cst_54 = arith.constant 3.200000e+01 : f32
    %189 = vector.broadcast %cst_54 : f32 to vector<16x1xf32>
    %190 = arith.divf %188, %189 : vector<16x1xf32>
    %191 = vector.broadcast %181 : vector<16x1xf32> to vector<16x32xf32>
    %192 = arith.subf %177, %191 : vector<16x32xf32>
    %cst_55 = arith.constant 9.99999996E-13 : f32
    %193 = vector.broadcast %cst_55 : f32 to vector<16x1xf32>
    %194 = arith.addf %190, %193 : vector<16x1xf32>
    %195 = math.rsqrt %194 : vector<16x1xf32>
    %196 = vector.broadcast %195 : vector<16x1xf32> to vector<16x32xf32>
    %197 = arith.mulf %192, %196 : vector<16x32xf32>
    %198 = vector.broadcast %39 : vector<1x32xf32> to vector<16x32xf32>
    %199 = arith.mulf %197, %198 : vector<16x32xf32>
    %200 = vector.broadcast %40 : vector<1x32xf32> to vector<16x32xf32>
    %201 = arith.addf %199, %200 : vector<16x32xf32>
    %202 = vector.extract_strided_slice %0 {offsets = [16, 0], sizes = [1, 96], strides = [1, 1]} : vector<24x128xf32> to vector<1x96xf32>
    %203 = vector.extract_strided_slice %0 {offsets = [17, 0], sizes = [1, 32], strides = [1, 1]} : vector<24x128xf32> to vector<1x32xf32>
    %204 = vector.extract_strided_slice %0 {offsets = [18, 0], sizes = [1, 32], strides = [1, 1]} : vector<24x128xf32> to vector<1x32xf32>
    %205 = vector.extract_strided_slice %0 {offsets = [19, 0], sizes = [1, 32], strides = [1, 1]} : vector<24x128xf32> to vector<1x32xf32>
    %206 = vector.extract_strided_slice %0 {offsets = [20, 0], sizes = [1, 64], strides = [1, 1]} : vector<24x128xf32> to vector<1x64xf32>
    %207 = vector.extract_strided_slice %0 {offsets = [21, 0], sizes = [1, 32], strides = [1, 1]} : vector<24x128xf32> to vector<1x32xf32>
    %208 = vector.extract_strided_slice %0 {offsets = [22, 0], sizes = [1, 32], strides = [1, 1]} : vector<24x128xf32> to vector<1x32xf32>
    %209 = vector.extract_strided_slice %0 {offsets = [23, 0], sizes = [1, 32], strides = [1, 1]} : vector<24x128xf32> to vector<1x32xf32>
    %c1 = arith.constant 1 : index
    %c0_56 = arith.constant 0 : index
    %c0_57 = arith.constant 0 : index
    %210 = vector.load %arg4[%c1, %c0_56, %c0_57] : memref<2x32x96xf32, #tpu.memory_space<vmem>>, vector<1x32x96xf32>
    %211 = vector.shape_cast %210 : vector<1x32x96xf32> to vector<32x96xf32>
    %cst_58 = arith.constant dense<0.000000e+00> : vector<16x96xf32>
    %212 = tpu.matmul %201, %211, %cst_58 {dimension_numbers = #tpu.dot_dimension_numbers<[1], [0], [0], [1], [0, 0, 1, 1], [], []>} : vector<16x32xf32>, vector<32x96xf32>, vector<16x96xf32> -> vector<16x96xf32>
    %213 = vector.broadcast %202 : vector<1x96xf32> to vector<16x96xf32>
    %214 = arith.addf %212, %213 : vector<16x96xf32>
    %215 = vector.extract_strided_slice %214 {offsets = [0, 0], sizes = [16, 32], strides = [1, 1]} : vector<16x96xf32> to vector<16x32xf32>
    %cst_59 = arith.constant 2.500000e-01 : f32
    %216 = vector.broadcast %cst_59 : f32 to vector<16x32xf32>
    %217 = arith.mulf %215, %216 : vector<16x32xf32>
    %218 = vector.extract_strided_slice %214 {offsets = [0, 32], sizes = [16, 32], strides = [1, 1]} : vector<16x96xf32> to vector<16x32xf32>
    %219 = vector.extract_strided_slice %214 {offsets = [0, 64], sizes = [16, 32], strides = [1, 1]} : vector<16x96xf32> to vector<16x32xf32>
    %220 = vector.extract_strided_slice %3 {offsets = [0, 8], sizes = [1, 8], strides = [1, 1]} : vector<16x128xf32> to vector<1x8xf32>
    %221 = vector.extract_strided_slice %217 {offsets = [0, 0], sizes = [8, 16], strides = [1, 1]} : vector<16x32xf32> to vector<8x16xf32>
    %222 = vector.extract_strided_slice %218 {offsets = [0, 0], sizes = [8, 16], strides = [1, 1]} : vector<16x32xf32> to vector<8x16xf32>
    %223 = vector.extract_strided_slice %219 {offsets = [0, 0], sizes = [8, 16], strides = [1, 1]} : vector<16x32xf32> to vector<8x16xf32>
    %cst_60 = arith.constant dense<0.000000e+00> : vector<8x8xf32>
    %224 = tpu.matmul %221, %222, %cst_60 {dimension_numbers = #tpu.dot_dimension_numbers<[1], [1], [0], [0], [0, 0, 1, 0], [], []>} : vector<8x16xf32>, vector<8x16xf32>, vector<8x8xf32> -> vector<8x8xf32>
    %225 = vector.broadcast %220 : vector<1x8xf32> to vector<8x8xf32>
    %226 = arith.addf %224, %225 : vector<8x8xf32>
    %cst_61 = arith.constant dense<0xFF800000> : vector<8xf32>
    %227 = vector.multi_reduction <maximumf>, %226, %cst_61 [1] : vector<8x8xf32> to vector<8xf32>
    %228 = vector.shape_cast %227 : vector<8xf32> to vector<8x1xf32>
    %229 = vector.broadcast %228 : vector<8x1xf32> to vector<8x8xf32>
    %230 = arith.subf %226, %229 : vector<8x8xf32>
    %231 = math.exp %230 : vector<8x8xf32>
    %cst_62 = arith.constant dense<0.000000e+00> : vector<8xf32>
    %232 = vector.multi_reduction <add>, %231, %cst_62 [1] : vector<8x8xf32> to vector<8xf32>
    %233 = vector.shape_cast %232 : vector<8xf32> to vector<8x1xf32>
    %234 = tpu.reciprocal %233 {approx = true} : vector<8x1xf32> -> vector<8x1xf32>
    %235 = vector.broadcast %234 : vector<8x1xf32> to vector<8x8xf32>
    %236 = arith.mulf %231, %235 : vector<8x8xf32>
    %cst_63 = arith.constant dense<0.000000e+00> : vector<8x16xf32>
    %237 = tpu.matmul %236, %223, %cst_63 {dimension_numbers = #tpu.dot_dimension_numbers<[1], [0], [0], [1], [0, 0, 1, 1], [], []>} : vector<8x8xf32>, vector<8x16xf32>, vector<8x16xf32> -> vector<8x16xf32>
    %238 = vector.extract_strided_slice %217 {offsets = [0, 16], sizes = [8, 16], strides = [1, 1]} : vector<16x32xf32> to vector<8x16xf32>
    %239 = vector.extract_strided_slice %218 {offsets = [0, 16], sizes = [8, 16], strides = [1, 1]} : vector<16x32xf32> to vector<8x16xf32>
    %240 = vector.extract_strided_slice %219 {offsets = [0, 16], sizes = [8, 16], strides = [1, 1]} : vector<16x32xf32> to vector<8x16xf32>
    %cst_64 = arith.constant dense<0.000000e+00> : vector<8x8xf32>
    %241 = tpu.matmul %238, %239, %cst_64 {dimension_numbers = #tpu.dot_dimension_numbers<[1], [1], [0], [0], [0, 0, 1, 0], [], []>} : vector<8x16xf32>, vector<8x16xf32>, vector<8x8xf32> -> vector<8x8xf32>
    %242 = vector.broadcast %220 : vector<1x8xf32> to vector<8x8xf32>
    %243 = arith.addf %241, %242 : vector<8x8xf32>
    %cst_65 = arith.constant dense<0xFF800000> : vector<8xf32>
    %244 = vector.multi_reduction <maximumf>, %243, %cst_65 [1] : vector<8x8xf32> to vector<8xf32>
    %245 = vector.shape_cast %244 : vector<8xf32> to vector<8x1xf32>
    %246 = vector.broadcast %245 : vector<8x1xf32> to vector<8x8xf32>
    %247 = arith.subf %243, %246 : vector<8x8xf32>
    %248 = math.exp %247 : vector<8x8xf32>
    %cst_66 = arith.constant dense<0.000000e+00> : vector<8xf32>
    %249 = vector.multi_reduction <add>, %248, %cst_66 [1] : vector<8x8xf32> to vector<8xf32>
    %250 = vector.shape_cast %249 : vector<8xf32> to vector<8x1xf32>
    %251 = tpu.reciprocal %250 {approx = true} : vector<8x1xf32> -> vector<8x1xf32>
    %252 = vector.broadcast %251 : vector<8x1xf32> to vector<8x8xf32>
    %253 = arith.mulf %248, %252 : vector<8x8xf32>
    %cst_67 = arith.constant dense<0.000000e+00> : vector<8x16xf32>
    %254 = tpu.matmul %253, %240, %cst_67 {dimension_numbers = #tpu.dot_dimension_numbers<[1], [0], [0], [1], [0, 0, 1, 1], [], []>} : vector<8x8xf32>, vector<8x16xf32>, vector<8x16xf32> -> vector<8x16xf32>
    %255 = tpu.concatenate %237, %254 in 1 : vector<8x16xf32>, vector<8x16xf32> -> vector<8x32xf32>
    %256 = vector.extract_strided_slice %3 {offsets = [8, 8], sizes = [1, 8], strides = [1, 1]} : vector<16x128xf32> to vector<1x8xf32>
    %257 = vector.extract_strided_slice %217 {offsets = [8, 0], sizes = [8, 16], strides = [1, 1]} : vector<16x32xf32> to vector<8x16xf32>
    %258 = vector.extract_strided_slice %218 {offsets = [8, 0], sizes = [8, 16], strides = [1, 1]} : vector<16x32xf32> to vector<8x16xf32>
    %259 = vector.extract_strided_slice %219 {offsets = [8, 0], sizes = [8, 16], strides = [1, 1]} : vector<16x32xf32> to vector<8x16xf32>
    %cst_68 = arith.constant dense<0.000000e+00> : vector<8x8xf32>
    %260 = tpu.matmul %257, %258, %cst_68 {dimension_numbers = #tpu.dot_dimension_numbers<[1], [1], [0], [0], [0, 0, 1, 0], [], []>} : vector<8x16xf32>, vector<8x16xf32>, vector<8x8xf32> -> vector<8x8xf32>
    %261 = vector.broadcast %256 : vector<1x8xf32> to vector<8x8xf32>
    %262 = arith.addf %260, %261 : vector<8x8xf32>
    %cst_69 = arith.constant dense<0xFF800000> : vector<8xf32>
    %263 = vector.multi_reduction <maximumf>, %262, %cst_69 [1] : vector<8x8xf32> to vector<8xf32>
    %264 = vector.shape_cast %263 : vector<8xf32> to vector<8x1xf32>
    %265 = vector.broadcast %264 : vector<8x1xf32> to vector<8x8xf32>
    %266 = arith.subf %262, %265 : vector<8x8xf32>
    %267 = math.exp %266 : vector<8x8xf32>
    %cst_70 = arith.constant dense<0.000000e+00> : vector<8xf32>
    %268 = vector.multi_reduction <add>, %267, %cst_70 [1] : vector<8x8xf32> to vector<8xf32>
    %269 = vector.shape_cast %268 : vector<8xf32> to vector<8x1xf32>
    %270 = tpu.reciprocal %269 {approx = true} : vector<8x1xf32> -> vector<8x1xf32>
    %271 = vector.broadcast %270 : vector<8x1xf32> to vector<8x8xf32>
    %272 = arith.mulf %267, %271 : vector<8x8xf32>
    %cst_71 = arith.constant dense<0.000000e+00> : vector<8x16xf32>
    %273 = tpu.matmul %272, %259, %cst_71 {dimension_numbers = #tpu.dot_dimension_numbers<[1], [0], [0], [1], [0, 0, 1, 1], [], []>} : vector<8x8xf32>, vector<8x16xf32>, vector<8x16xf32> -> vector<8x16xf32>
    %274 = vector.extract_strided_slice %217 {offsets = [8, 16], sizes = [8, 16], strides = [1, 1]} : vector<16x32xf32> to vector<8x16xf32>
    %275 = vector.extract_strided_slice %218 {offsets = [8, 16], sizes = [8, 16], strides = [1, 1]} : vector<16x32xf32> to vector<8x16xf32>
    %276 = vector.extract_strided_slice %219 {offsets = [8, 16], sizes = [8, 16], strides = [1, 1]} : vector<16x32xf32> to vector<8x16xf32>
    %cst_72 = arith.constant dense<0.000000e+00> : vector<8x8xf32>
    %277 = tpu.matmul %274, %275, %cst_72 {dimension_numbers = #tpu.dot_dimension_numbers<[1], [1], [0], [0], [0, 0, 1, 0], [], []>} : vector<8x16xf32>, vector<8x16xf32>, vector<8x8xf32> -> vector<8x8xf32>
    %278 = vector.broadcast %256 : vector<1x8xf32> to vector<8x8xf32>
    %279 = arith.addf %277, %278 : vector<8x8xf32>
    %cst_73 = arith.constant dense<0xFF800000> : vector<8xf32>
    %280 = vector.multi_reduction <maximumf>, %279, %cst_73 [1] : vector<8x8xf32> to vector<8xf32>
    %281 = vector.shape_cast %280 : vector<8xf32> to vector<8x1xf32>
    %282 = vector.broadcast %281 : vector<8x1xf32> to vector<8x8xf32>
    %283 = arith.subf %279, %282 : vector<8x8xf32>
    %284 = math.exp %283 : vector<8x8xf32>
    %cst_74 = arith.constant dense<0.000000e+00> : vector<8xf32>
    %285 = vector.multi_reduction <add>, %284, %cst_74 [1] : vector<8x8xf32> to vector<8xf32>
    %286 = vector.shape_cast %285 : vector<8xf32> to vector<8x1xf32>
    %287 = tpu.reciprocal %286 {approx = true} : vector<8x1xf32> -> vector<8x1xf32>
    %288 = vector.broadcast %287 : vector<8x1xf32> to vector<8x8xf32>
    %289 = arith.mulf %284, %288 : vector<8x8xf32>
    %cst_75 = arith.constant dense<0.000000e+00> : vector<8x16xf32>
    %290 = tpu.matmul %289, %276, %cst_75 {dimension_numbers = #tpu.dot_dimension_numbers<[1], [0], [0], [1], [0, 0, 1, 1], [], []>} : vector<8x8xf32>, vector<8x16xf32>, vector<8x16xf32> -> vector<8x16xf32>
    %291 = tpu.concatenate %273, %290 in 1 : vector<8x16xf32>, vector<8x16xf32> -> vector<8x32xf32>
    %292 = tpu.concatenate %255, %291 in 0 : vector<8x32xf32>, vector<8x32xf32> -> vector<16x32xf32>
    %c1_76 = arith.constant 1 : index
    %c0_77 = arith.constant 0 : index
    %c0_78 = arith.constant 0 : index
    %293 = vector.load %arg5[%c1_76, %c0_77, %c0_78] : memref<2x32x32xf32, #tpu.memory_space<vmem>>, vector<1x32x32xf32>
    %294 = vector.shape_cast %293 : vector<1x32x32xf32> to vector<32x32xf32>
    %cst_79 = arith.constant dense<0.000000e+00> : vector<16x32xf32>
    %295 = tpu.matmul %292, %294, %cst_79 {dimension_numbers = #tpu.dot_dimension_numbers<[1], [0], [0], [1], [0, 0, 1, 1], [], []>} : vector<16x32xf32>, vector<32x32xf32>, vector<16x32xf32> -> vector<16x32xf32>
    %296 = vector.broadcast %203 : vector<1x32xf32> to vector<16x32xf32>
    %297 = arith.addf %295, %296 : vector<16x32xf32>
    %298 = arith.addf %201, %297 : vector<16x32xf32>
    %cst_80 = arith.constant dense<0.000000e+00> : vector<16xf32>
    %299 = vector.multi_reduction <add>, %298, %cst_80 [1] : vector<16x32xf32> to vector<16xf32>
    %300 = vector.shape_cast %299 : vector<16xf32> to vector<16x1xf32>
    %cst_81 = arith.constant 3.200000e+01 : f32
    %301 = vector.broadcast %cst_81 : f32 to vector<16x1xf32>
    %302 = arith.divf %300, %301 : vector<16x1xf32>
    %303 = vector.broadcast %302 : vector<16x1xf32> to vector<16x32xf32>
    %304 = arith.subf %298, %303 : vector<16x32xf32>
    %305 = vector.broadcast %302 : vector<16x1xf32> to vector<16x32xf32>
    %306 = arith.subf %298, %305 : vector<16x32xf32>
    %307 = arith.mulf %304, %306 : vector<16x32xf32>
    %cst_82 = arith.constant dense<0.000000e+00> : vector<16xf32>
    %308 = vector.multi_reduction <add>, %307, %cst_82 [1] : vector<16x32xf32> to vector<16xf32>
    %309 = vector.shape_cast %308 : vector<16xf32> to vector<16x1xf32>
    %cst_83 = arith.constant 3.200000e+01 : f32
    %310 = vector.broadcast %cst_83 : f32 to vector<16x1xf32>
    %311 = arith.divf %309, %310 : vector<16x1xf32>
    %312 = vector.broadcast %302 : vector<16x1xf32> to vector<16x32xf32>
    %313 = arith.subf %298, %312 : vector<16x32xf32>
    %cst_84 = arith.constant 9.99999996E-13 : f32
    %314 = vector.broadcast %cst_84 : f32 to vector<16x1xf32>
    %315 = arith.addf %311, %314 : vector<16x1xf32>
    %316 = math.rsqrt %315 : vector<16x1xf32>
    %317 = vector.broadcast %316 : vector<16x1xf32> to vector<16x32xf32>
    %318 = arith.mulf %313, %317 : vector<16x32xf32>
    %319 = vector.broadcast %204 : vector<1x32xf32> to vector<16x32xf32>
    %320 = arith.mulf %318, %319 : vector<16x32xf32>
    %321 = vector.broadcast %205 : vector<1x32xf32> to vector<16x32xf32>
    %322 = arith.addf %320, %321 : vector<16x32xf32>
    %c1_85 = arith.constant 1 : index
    %c0_86 = arith.constant 0 : index
    %c0_87 = arith.constant 0 : index
    %323 = vector.load %arg6[%c1_85, %c0_86, %c0_87] : memref<2x32x64xf32, #tpu.memory_space<vmem>>, vector<1x32x64xf32>
    %324 = vector.shape_cast %323 : vector<1x32x64xf32> to vector<32x64xf32>
    %cst_88 = arith.constant dense<0.000000e+00> : vector<16x64xf32>
    %325 = tpu.matmul %322, %324, %cst_88 {dimension_numbers = #tpu.dot_dimension_numbers<[1], [0], [0], [1], [0, 0, 1, 1], [], []>} : vector<16x32xf32>, vector<32x64xf32>, vector<16x64xf32> -> vector<16x64xf32>
    %326 = vector.broadcast %206 : vector<1x64xf32> to vector<16x64xf32>
    %327 = arith.addf %325, %326 : vector<16x64xf32>
    %cst_89 = arith.constant 5.000000e-01 : f32
    %328 = vector.broadcast %cst_89 : f32 to vector<16x64xf32>
    %329 = arith.mulf %328, %327 : vector<16x64xf32>
    %cst_90 = arith.constant 4.471500e-02 : f32
    %330 = vector.broadcast %cst_90 : f32 to vector<16x64xf32>
    %331 = arith.mulf %330, %327 : vector<16x64xf32>
    %332 = arith.mulf %331, %327 : vector<16x64xf32>
    %333 = arith.mulf %332, %327 : vector<16x64xf32>
    %334 = arith.addf %327, %333 : vector<16x64xf32>
    %cst_91 = arith.constant 0.797884583 : f32
    %335 = vector.broadcast %cst_91 : f32 to vector<16x64xf32>
    %336 = arith.mulf %335, %334 : vector<16x64xf32>
    %337 = math.tanh %336 : vector<16x64xf32>
    %cst_92 = arith.constant 1.000000e+00 : f32
    %338 = vector.broadcast %cst_92 : f32 to vector<16x64xf32>
    %339 = arith.addf %338, %337 : vector<16x64xf32>
    %340 = arith.mulf %329, %339 : vector<16x64xf32>
    %c1_93 = arith.constant 1 : index
    %c0_94 = arith.constant 0 : index
    %c0_95 = arith.constant 0 : index
    %341 = vector.load %arg7[%c1_93, %c0_94, %c0_95] : memref<2x64x32xf32, #tpu.memory_space<vmem>>, vector<1x64x32xf32>
    %342 = vector.shape_cast %341 : vector<1x64x32xf32> to vector<64x32xf32>
    %cst_96 = arith.constant dense<0.000000e+00> : vector<16x32xf32>
    %343 = tpu.matmul %340, %342, %cst_96 {dimension_numbers = #tpu.dot_dimension_numbers<[1], [0], [0], [1], [0, 0, 1, 1], [], []>} : vector<16x64xf32>, vector<64x32xf32>, vector<16x32xf32> -> vector<16x32xf32>
    %344 = vector.broadcast %207 : vector<1x32xf32> to vector<16x32xf32>
    %345 = arith.addf %343, %344 : vector<16x32xf32>
    %346 = arith.addf %322, %345 : vector<16x32xf32>
    %cst_97 = arith.constant dense<0.000000e+00> : vector<16xf32>
    %347 = vector.multi_reduction <add>, %346, %cst_97 [1] : vector<16x32xf32> to vector<16xf32>
    %348 = vector.shape_cast %347 : vector<16xf32> to vector<16x1xf32>
    %cst_98 = arith.constant 3.200000e+01 : f32
    %349 = vector.broadcast %cst_98 : f32 to vector<16x1xf32>
    %350 = arith.divf %348, %349 : vector<16x1xf32>
    %351 = vector.broadcast %350 : vector<16x1xf32> to vector<16x32xf32>
    %352 = arith.subf %346, %351 : vector<16x32xf32>
    %353 = vector.broadcast %350 : vector<16x1xf32> to vector<16x32xf32>
    %354 = arith.subf %346, %353 : vector<16x32xf32>
    %355 = arith.mulf %352, %354 : vector<16x32xf32>
    %cst_99 = arith.constant dense<0.000000e+00> : vector<16xf32>
    %356 = vector.multi_reduction <add>, %355, %cst_99 [1] : vector<16x32xf32> to vector<16xf32>
    %357 = vector.shape_cast %356 : vector<16xf32> to vector<16x1xf32>
    %cst_100 = arith.constant 3.200000e+01 : f32
    %358 = vector.broadcast %cst_100 : f32 to vector<16x1xf32>
    %359 = arith.divf %357, %358 : vector<16x1xf32>
    %360 = vector.broadcast %350 : vector<16x1xf32> to vector<16x32xf32>
    %361 = arith.subf %346, %360 : vector<16x32xf32>
    %cst_101 = arith.constant 9.99999996E-13 : f32
    %362 = vector.broadcast %cst_101 : f32 to vector<16x1xf32>
    %363 = arith.addf %359, %362 : vector<16x1xf32>
    %364 = math.rsqrt %363 : vector<16x1xf32>
    %365 = vector.broadcast %364 : vector<16x1xf32> to vector<16x32xf32>
    %366 = arith.mulf %361, %365 : vector<16x32xf32>
    %367 = vector.broadcast %208 : vector<1x32xf32> to vector<16x32xf32>
    %368 = arith.mulf %366, %367 : vector<16x32xf32>
    %369 = vector.broadcast %209 : vector<1x32xf32> to vector<16x32xf32>
    %370 = arith.addf %368, %369 : vector<16x32xf32>
    %c0_102 = arith.constant 0 : index
    %c0_103 = arith.constant 0 : index
    %371 = vector.load %arg8[%c0_102, %c0_103] : memref<32x32xf32, #tpu.memory_space<vmem>>, vector<32x32xf32>
    %cst_104 = arith.constant dense<0.000000e+00> : vector<16x32xf32>
    %372 = tpu.matmul %370, %371, %cst_104 {dimension_numbers = #tpu.dot_dimension_numbers<[1], [0], [0], [1], [0, 0, 1, 1], [], []>} : vector<16x32xf32>, vector<32x32xf32>, vector<16x32xf32> -> vector<16x32xf32>
    %373 = vector.extract_strided_slice %0 {offsets = [2, 0], sizes = [1, 32], strides = [1, 1]} : vector<24x128xf32> to vector<1x32xf32>
    %374 = vector.broadcast %373 : vector<1x32xf32> to vector<16x32xf32>
    %375 = arith.addf %372, %374 : vector<16x32xf32>
    %cst_105 = arith.constant 5.000000e-01 : f32
    %376 = vector.broadcast %cst_105 : f32 to vector<16x32xf32>
    %377 = arith.mulf %376, %375 : vector<16x32xf32>
    %cst_106 = arith.constant 4.471500e-02 : f32
    %378 = vector.broadcast %cst_106 : f32 to vector<16x32xf32>
    %379 = arith.mulf %378, %375 : vector<16x32xf32>
    %380 = arith.mulf %379, %375 : vector<16x32xf32>
    %381 = arith.mulf %380, %375 : vector<16x32xf32>
    %382 = arith.addf %375, %381 : vector<16x32xf32>
    %cst_107 = arith.constant 0.797884583 : f32
    %383 = vector.broadcast %cst_107 : f32 to vector<16x32xf32>
    %384 = arith.mulf %383, %382 : vector<16x32xf32>
    %385 = math.tanh %384 : vector<16x32xf32>
    %cst_108 = arith.constant 1.000000e+00 : f32
    %386 = vector.broadcast %cst_108 : f32 to vector<16x32xf32>
    %387 = arith.addf %386, %385 : vector<16x32xf32>
    %388 = arith.mulf %377, %387 : vector<16x32xf32>
    %389 = vector.extract_strided_slice %0 {offsets = [3, 0], sizes = [1, 32], strides = [1, 1]} : vector<24x128xf32> to vector<1x32xf32>
    %390 = vector.extract_strided_slice %0 {offsets = [4, 0], sizes = [1, 32], strides = [1, 1]} : vector<24x128xf32> to vector<1x32xf32>
    %cst_109 = arith.constant dense<0.000000e+00> : vector<16xf32>
    %391 = vector.multi_reduction <add>, %388, %cst_109 [1] : vector<16x32xf32> to vector<16xf32>
    %392 = vector.shape_cast %391 : vector<16xf32> to vector<16x1xf32>
    %cst_110 = arith.constant 3.200000e+01 : f32
    %393 = vector.broadcast %cst_110 : f32 to vector<16x1xf32>
    %394 = arith.divf %392, %393 : vector<16x1xf32>
    %395 = vector.broadcast %394 : vector<16x1xf32> to vector<16x32xf32>
    %396 = arith.subf %388, %395 : vector<16x32xf32>
    %397 = vector.broadcast %394 : vector<16x1xf32> to vector<16x32xf32>
    %398 = arith.subf %388, %397 : vector<16x32xf32>
    %399 = arith.mulf %396, %398 : vector<16x32xf32>
    %cst_111 = arith.constant dense<0.000000e+00> : vector<16xf32>
    %400 = vector.multi_reduction <add>, %399, %cst_111 [1] : vector<16x32xf32> to vector<16xf32>
    %401 = vector.shape_cast %400 : vector<16xf32> to vector<16x1xf32>
    %cst_112 = arith.constant 3.200000e+01 : f32
    %402 = vector.broadcast %cst_112 : f32 to vector<16x1xf32>
    %403 = arith.divf %401, %402 : vector<16x1xf32>
    %404 = vector.broadcast %394 : vector<16x1xf32> to vector<16x32xf32>
    %405 = arith.subf %388, %404 : vector<16x32xf32>
    %cst_113 = arith.constant 9.99999996E-13 : f32
    %406 = vector.broadcast %cst_113 : f32 to vector<16x1xf32>
    %407 = arith.addf %403, %406 : vector<16x1xf32>
    %408 = math.rsqrt %407 : vector<16x1xf32>
    %409 = vector.broadcast %408 : vector<16x1xf32> to vector<16x32xf32>
    %410 = arith.mulf %405, %409 : vector<16x32xf32>
    %411 = vector.broadcast %389 : vector<1x32xf32> to vector<16x32xf32>
    %412 = arith.mulf %410, %411 : vector<16x32xf32>
    %413 = vector.broadcast %390 : vector<1x32xf32> to vector<16x32xf32>
    %414 = arith.addf %412, %413 : vector<16x32xf32>
    %c0_114 = arith.constant 0 : index
    %c0_115 = arith.constant 0 : index
    %415 = vector.load %arg9[%c0_114, %c0_115] : memref<128x32xf32, #tpu.memory_space<vmem>>, vector<128x32xf32>
    %cst_116 = arith.constant dense<0.000000e+00> : vector<16x128xf32>
    %416 = tpu.matmul %414, %415, %cst_116 {dimension_numbers = #tpu.dot_dimension_numbers<[1], [1], [0], [0], [0, 0, 1, 0], [], []>} : vector<16x32xf32>, vector<128x32xf32>, vector<16x128xf32> -> vector<16x128xf32>
    %417 = vector.extract_strided_slice %0 {offsets = [5, 0], sizes = [1, 128], strides = [1, 1]} : vector<24x128xf32> to vector<1x128xf32>
    %418 = vector.broadcast %417 : vector<1x128xf32> to vector<16x128xf32>
    %419 = arith.addf %416, %418 : vector<16x128xf32>
    %c0_117 = arith.constant 0 : index
    %c0_118 = arith.constant 0 : index
    %420 = vector.load %arg10[%c0_117, %c0_118] : memref<16x128xf32, #tpu.memory_space<vmem>>, vector<16x128xf32>
    tpu.vector_store %arg10[%c0_117, %c0_118], %419 {strides = array<i32>} : memref<16x128xf32, #tpu.memory_space<vmem>>, vector<16x128xf32>,
    %cst_119 = arith.constant dense<0xFF800000> : vector<16xf32>
    %421 = vector.multi_reduction <maximumf>, %419, %cst_119 [1] : vector<16x128xf32> to vector<16xf32>
    %422 = vector.shape_cast %421 : vector<16xf32> to vector<16x1xf32>
    %423 = vector.broadcast %422 : vector<16x1xf32> to vector<16x128xf32>
    %424 = arith.subf %419, %423 : vector<16x128xf32>
    %425 = math.exp %424 : vector<16x128xf32>
    %cst_120 = arith.constant dense<0.000000e+00> : vector<16xf32>
    %426 = vector.multi_reduction <add>, %425, %cst_120 [1] : vector<16x128xf32> to vector<16xf32>
    %427 = vector.shape_cast %426 : vector<16xf32> to vector<16x1xf32>
    %428 = math.log %427 : vector<16x1xf32>
    %429 = arith.addf %422, %428 : vector<16x1xf32>
    %430 = arith.mulf %419, %2 : vector<16x128xf32>
    %cst_121 = arith.constant dense<0.000000e+00> : vector<16xf32>
    %431 = vector.multi_reduction <add>, %430, %cst_121 [1] : vector<16x128xf32> to vector<16xf32>
    %432 = vector.shape_cast %431 : vector<16xf32> to vector<16x1xf32>
    %cst_122 = arith.constant dense<0.000000e+00> : vector<16xf32>
    %433 = vector.multi_reduction <add>, %2, %cst_122 [1] : vector<16x128xf32> to vector<16xf32>
    %434 = vector.shape_cast %433 : vector<16xf32> to vector<16x1xf32>
    %435 = arith.subf %429, %432 : vector<16x1xf32>
    %436 = arith.mulf %435, %434 : vector<16x1xf32>
    %437 = vector.shape_cast %436 : vector<16x1xf32> to vector<1x16x1xf32>
    %cst_123 = arith.constant dense<0.000000e+00> : vector<1xf32>
    %438 = vector.multi_reduction <add>, %437, %cst_123 [1, 2] : vector<1x16x1xf32> to vector<1xf32>
    %439 = vector.shape_cast %438 : vector<1xf32> to vector<1x1x1xf32>
    %440 = vector.extract %439[0, 0, 0] : f32 from vector<1x1x1xf32>
    %c0_124 = arith.constant 0 : index
    %441 = memref.load %arg11[%c0_124] : memref<4xf32, #tpu.memory_space<smem>>
    memref.store %440, %arg11[%c0_124] : memref<4xf32, #tpu.memory_space<smem>>
    %442 = vector.shape_cast %434 : vector<16x1xf32> to vector<1x16x1xf32>
    %cst_125 = arith.constant dense<0.000000e+00> : vector<1xf32>
    %443 = vector.multi_reduction <add>, %442, %cst_125 [1, 2] : vector<1x16x1xf32> to vector<1xf32>
    %444 = vector.shape_cast %443 : vector<1xf32> to vector<1x1x1xf32>
    %445 = vector.extract %444[0, 0, 0] : f32 from vector<1x1x1xf32>
    %c1_126 = arith.constant 1 : index
    %446 = memref.load %arg11[%c1_126] : memref<4xf32, #tpu.memory_space<smem>>
    memref.store %445, %arg11[%c1_126] : memref<4xf32, #tpu.memory_space<smem>>
    %447 = vector.extract_strided_slice %0 {offsets = [6, 0], sizes = [1, 32], strides = [1, 1]} : vector<24x128xf32> to vector<1x32xf32>
    %448 = vector.extract_strided_slice %0 {offsets = [7, 0], sizes = [1, 1], strides = [1, 1]} : vector<24x128xf32> to vector<1x1xf32>
    %449 = vector.broadcast %447 : vector<1x32xf32> to vector<16x32xf32>
    %450 = arith.mulf %370, %449 : vector<16x32xf32>
    %cst_127 = arith.constant dense<0.000000e+00> : vector<16xf32>
    %451 = vector.multi_reduction <add>, %450, %cst_127 [1] : vector<16x32xf32> to vector<16xf32>
    %452 = vector.shape_cast %451 : vector<16xf32> to vector<16x1xf32>
    %453 = vector.broadcast %448 : vector<1x1xf32> to vector<16x1xf32>
    %454 = arith.addf %452, %453 : vector<16x1xf32>
    %cst_128 = arith.constant 0.000000e+00 : f32
    %455 = vector.broadcast %cst_128 : f32 to vector<16x1xf32>
    %456 = arith.subf %455, %454 : vector<16x1xf32>
    %457 = math.exp %456 : vector<16x1xf32>
    %cst_129 = arith.constant 1.000000e+00 : f32
    %458 = vector.broadcast %cst_129 : f32 to vector<16x1xf32>
    %459 = arith.addf %458, %457 : vector<16x1xf32>
    %cst_130 = arith.constant 1.000000e+00 : f32
    %460 = vector.broadcast %cst_130 : f32 to vector<16x1xf32>
    %461 = arith.divf %460, %459 : vector<16x1xf32>
    %cst_131 = arith.constant -2.500000e-01 : f32
    %462 = vector.broadcast %cst_131 : f32 to vector<16x1xf32>
    %463 = arith.mulf %462, %4 : vector<16x1xf32>
    %cst_132 = arith.constant 1.000000e+00 : f32
    %464 = vector.broadcast %cst_132 : f32 to vector<16x1xf32>
    %465 = arith.subf %464, %461 : vector<16x1xf32>
    %466 = arith.mulf %463, %465 : vector<16x1xf32>
    %cst_133 = arith.constant 1.000000e+00 : f32
    %467 = vector.broadcast %cst_133 : f32 to vector<16x1xf32>
    %468 = arith.subf %467, %461 : vector<16x1xf32>
    %469 = arith.mulf %466, %468 : vector<16x1xf32>
    %cst_134 = arith.constant 9.99999971E-10 : f32
    %470 = vector.broadcast %cst_134 : f32 to vector<16x1xf32>
    %471 = arith.addf %461, %470 : vector<16x1xf32>
    %472 = math.log %471 : vector<16x1xf32>
    %473 = arith.mulf %469, %472 : vector<16x1xf32>
    %cst_135 = arith.constant 1.000000e+00 : f32
    %474 = vector.broadcast %cst_135 : f32 to vector<16x1xf32>
    %475 = arith.subf %474, %4 : vector<16x1xf32>
    %cst_136 = arith.constant -7.500000e-01 : f32
    %476 = vector.broadcast %cst_136 : f32 to vector<16x1xf32>
    %477 = arith.mulf %476, %475 : vector<16x1xf32>
    %478 = arith.mulf %477, %461 : vector<16x1xf32>
    %479 = arith.mulf %478, %461 : vector<16x1xf32>
    %cst_137 = arith.constant 1.000000e+00 : f32
    %480 = vector.broadcast %cst_137 : f32 to vector<16x1xf32>
    %481 = arith.subf %480, %461 : vector<16x1xf32>
    %cst_138 = arith.constant 9.99999971E-10 : f32
    %482 = vector.broadcast %cst_138 : f32 to vector<16x1xf32>
    %483 = arith.addf %481, %482 : vector<16x1xf32>
    %484 = math.log %483 : vector<16x1xf32>
    %485 = arith.mulf %479, %484 : vector<16x1xf32>
    %486 = arith.addf %473, %485 : vector<16x1xf32>
    %487 = arith.mulf %486, %5 : vector<16x1xf32>
    %488 = vector.shape_cast %487 : vector<16x1xf32> to vector<1x16x1xf32>
    %cst_139 = arith.constant dense<0.000000e+00> : vector<1xf32>
    %489 = vector.multi_reduction <add>, %488, %cst_139 [1, 2] : vector<1x16x1xf32> to vector<1xf32>
    %490 = vector.shape_cast %489 : vector<1xf32> to vector<1x1x1xf32>
    %491 = vector.extract %490[0, 0, 0] : f32 from vector<1x1x1xf32>
    %c2 = arith.constant 2 : index
    %492 = memref.load %arg11[%c2] : memref<4xf32, #tpu.memory_space<smem>>
    memref.store %491, %arg11[%c2] : memref<4xf32, #tpu.memory_space<smem>>
    %493 = vector.shape_cast %5 : vector<16x1xf32> to vector<1x16x1xf32>
    %cst_140 = arith.constant dense<0.000000e+00> : vector<1xf32>
    %494 = vector.multi_reduction <add>, %493, %cst_140 [1, 2] : vector<1x16x1xf32> to vector<1xf32>
    %495 = vector.shape_cast %494 : vector<1xf32> to vector<1x1x1xf32>
    %496 = vector.extract %495[0, 0, 0] : f32 from vector<1x1x1xf32>
    %c3 = arith.constant 3 : index
    %497 = memref.load %arg11[%c3] : memref<4xf32, #tpu.memory_space<smem>>
    memref.store %496, %arg11[%c3] : memref<4xf32, #tpu.memory_space<smem>>
    return
  }
  func.func @transform_0(%arg0: i32) -> (i32, i32) {
    %c0_i32 = arith.constant 0 : i32
    %c0_i32_0 = arith.constant 0 : i32
    %c0_i32_1 = arith.constant 0 : i32
    return %c0_i32, %c0_i32_0 : i32, i32
  }
  func.func @transform_1(%arg0: i32) -> (i32, i32) {
    %c0_i32 = arith.constant 0 : i32
    %c0_i32_0 = arith.constant 0 : i32
    %c0_i32_1 = arith.constant 0 : i32
    return %c0_i32, %c0_i32_0 : i32, i32
  }
  func.func @transform_2(%arg0: i32) -> (i32, i32) {
    %c0_i32 = arith.constant 0 : i32
    %c0_i32_0 = arith.constant 0 : i32
    %c0_i32_1 = arith.constant 0 : i32
    return %c0_i32, %c0_i32_0 : i32, i32
  }
  func.func @transform_3(%arg0: i32) -> (i32, i32, i32) {
    %c0_i32 = arith.constant 0 : i32
    %c0_i32_0 = arith.constant 0 : i32
    %c0_i32_1 = arith.constant 0 : i32
    %c0_i32_2 = arith.constant 0 : i32
    return %c0_i32, %c0_i32_0, %c0_i32_1 : i32, i32, i32
  }
  func.func @transform_4(%arg0: i32) -> (i32, i32, i32) {
    %c0_i32 = arith.constant 0 : i32
    %c0_i32_0 = arith.constant 0 : i32
    %c0_i32_1 = arith.constant 0 : i32
    %c0_i32_2 = arith.constant 0 : i32
    return %c0_i32, %c0_i32_0, %c0_i32_1 : i32, i32, i32
  }
  func.func @transform_5(%arg0: i32) -> (i32, i32, i32) {
    %c0_i32 = arith.constant 0 : i32
    %c0_i32_0 = arith.constant 0 : i32
    %c0_i32_1 = arith.constant 0 : i32
    %c0_i32_2 = arith.constant 0 : i32
    return %c0_i32, %c0_i32_0, %c0_i32_1 : i32, i32, i32
  }
  func.func @transform_6(%arg0: i32) -> (i32, i32, i32) {
    %c0_i32 = arith.constant 0 : i32
    %c0_i32_0 = arith.constant 0 : i32
    %c0_i32_1 = arith.constant 0 : i32
    %c0_i32_2 = arith.constant 0 : i32
    return %c0_i32, %c0_i32_0, %c0_i32_1 : i32, i32, i32
  }
  func.func @transform_7(%arg0: i32) -> (i32, i32) {
    %c0_i32 = arith.constant 0 : i32
    %c0_i32_0 = arith.constant 0 : i32
    %c0_i32_1 = arith.constant 0 : i32
    return %c0_i32, %c0_i32_0 : i32, i32
  }
  func.func @transform_8(%arg0: i32) -> (i32, i32) {
    %c0_i32 = arith.constant 0 : i32
    %c0_i32_0 = arith.constant 0 : i32
    %c0_i32_1 = arith.constant 0 : i32
    return %c0_i32, %c0_i32_0 : i32, i32
  }
  func.func @transform_9(%arg0: i32) -> (i32, i32) {
    %c0_i32 = arith.constant 0 : i32
    %c0_i32_0 = arith.constant 0 : i32
    %c0_i32_1 = arith.constant 0 : i32
    return %c0_i32, %c0_i32_0 : i32, i32
  }
  func.func @transform_10(%arg0: i32) -> i32 {
    %c0_i32 = arith.constant 0 : i32
    %c0_i32_0 = arith.constant 0 : i32
    return %c0_i32 : i32
  }
}

</mosaic_0001>

<llo_original>
// kernel: eq.1
$region0: #{eq.1}
  %s0 = inlined_call_operand.vmem [shape: s32[2,8], index: 0, kind: input, shape index: {}]
  %s1 = inlined_call_operand.vmem [shape: s32[16], index: 1, kind: output, shape index: {}]
  $region1: #{eq.1} parent=0
    #allocation0 [shape = 'u8[4096]{0}', space=vmem, size = 0x1000, scoped, tag = 'scoped mem for output reshape']
    #allocation1 [shape = 'u8[4096]{0}', space=vmem, size = 0x1000, scoped, tag = 'scoped mem for input reshape']
    %s3 = ssub.s32 4, 1
    %v4 = vld [vmem:[%s0] sm:%s3]
    %5 = vst [vmem:[#allocation1] sm:%s3] %v4
    %v6 = vld [vmem:[#allocation1] sm:$0x1]
    %vm7 = vcmask 64512
    %8 = vst.msk [vmem:[#allocation0] sm:$0x1] %vm7, %v6
    %s9 = scalar_lea.vmem [#allocation1], 1
    %v10 = vld [vmem:[%s9] sm:$0x1]
    %11 = vrot.lane.b32.xlu0 %v10, 8
    %v12 = vpop.permute.xlu0 %11
    %vm13 = vcmask 130112
    %14 = vst.msk [vmem:[#allocation0] sm:$0x1] %vm13, %v12
    %s16 = ssub.s32 2, 1
    %v17 = vld [vmem:[#allocation0] sm:%s16]
    %s19 = ssub.s32 2, 1
    %20 = vst [vmem:[%s1] sm:%s19] %v17

// kernel: bert_mlm_detect_forward.1
$region0: #{bert_mlm_detect_forward.1}
  #allocation0 [shape = 'u32[]', space=smem, size = 0x4, offset = 0x4, fixed_abs, tag = 'smem constant byte address 0x4 - core index']
  #allocation1 [shape = 'u32[72,128]{1,0:T(1,128)}', space=vmem, size = 0x9000, scoped, tag = 'internal scratch']
  %s0 = inlined_call_operand.vmem [shape: f32[16,32], index: 0, kind: input, shape index: {}]
  %s1 = inlined_call_operand.vmem [shape: f32[32,128], index: 1, kind: input, shape index: {}]
  %s2 = inlined_call_operand.vmem [shape: f32[24,128], index: 2, kind: input, shape index: {}]
  %s3 = inlined_call_operand.vmem [shape: f32[2,32,96], index: 3, kind: input, shape index: {}]
  %s4 = inlined_call_operand.vmem [shape: f32[2,32,32], index: 4, kind: input, shape index: {}]
  %s5 = inlined_call_operand.vmem [shape: f32[2,32,64], index: 5, kind: input, shape index: {}]
  %s6 = inlined_call_operand.vmem [shape: f32[2,64,32], index: 6, kind: input, shape index: {}]
  %s7 = inlined_call_operand.vmem [shape: f32[32,32], index: 7, kind: input, shape index: {}]
  %s8 = inlined_call_operand.vmem [shape: f32[128,32], index: 8, kind: input, shape index: {}]
  %s9 = inlined_call_operand.hbm [shape: f32[16,128], index: 9, kind: output, shape index: {0}]
  %s10 = inlined_call_operand.vmem [shape: f32[4], index: 10, kind: output, shape index: {1}]
  %11 = xla_tuple %s9, %s10
  %s12 = sld [smem:[#allocation0]]
  $region54: #{bert_mlm_detect_forward.1} parent=0
    _
  %s14 = ssub.s32 1, %s12
  %s15 = scalar_select 0, %s14, %s12
  $region1: #{bert_mlm_detect_forward.1} parent=0
    #allocation2 [shape = 'u8[8192]{0}', space=vmem, size = 0x2000, scoped, tag = 'output window, operand 0, single buffered']
    #allocation3 [shape = 's32[1]{0}', space=sflag, size = 0x4, scoped, tag = 'scoped memory for bert_mlm_detect_forward.1']
    #allocation4 [shape = 's32[1]{0}', space=sflag, size = 0x4, scoped, tag = 'scoped memory for bert_mlm_detect_forward.1']
    #allocation5 [shape = 'u8[512]{0}', space=smem, size = 0x200, scoped, tag = 'output window, operand 1, single buffered']
    %16 = vsyncpa [#allocation3], 0
    %17 = vsyncpa [#allocation4], 0
    // Predicated region
    $region2: #{bert_mlm_detect_forward.1} parent=1 // pred_check
      _
    $region3: #{bert_mlm_detect_forward.1} parent=1 // pred_check_branch
      %19 = sbr.rel (0) target = $region5
    $region4: #{bert_mlm_detect_forward.1} parent=1 // pred_region
      _
    $region5: #{bert_mlm_detect_forward.1} parent=1 // pred_fallthru
      _
    // Predicated region
    $region6: #{bert_mlm_detect_forward.1} parent=1 // pred_check
      _
    $region7: #{bert_mlm_detect_forward.1} parent=1 // pred_check_branch
      %21 = sbr.rel (0) target = $region9
    $region8: #{bert_mlm_detect_forward.1} parent=1 // pred_region
      _
    $region9: #{bert_mlm_detect_forward.1} parent=1 // pred_fallthru
      _
    // Predicated region
    $region10: #{bert_mlm_detect_forward.1} parent=1 // pred_check
      _
    $region11: #{bert_mlm_detect_forward.1} parent=1 // pred_check_branch
      %23 = sbr.rel (0) target = $region13
    $region12: #{bert_mlm_detect_forward.1} parent=1 // pred_region
      _
    $region13: #{bert_mlm_detect_forward.1} parent=1 // pred_fallthru
      _
    // Predicated region
    $region14: #{bert_mlm_detect_forward.1} parent=1 // pred_check
      _
    $region15: #{bert_mlm_detect_forward.1} parent=1 // pred_check_branch
      %25 = sbr.rel (0) target = $region17
    $region16: #{bert_mlm_detect_forward.1} parent=1 // pred_region
      _
    $region17: #{bert_mlm_detect_forward.1} parent=1 // pred_fallthru
      _
    // Predicated region
    $region18: #{bert_mlm_detect_forward.1} parent=1 // pred_check
      _
    $region19: #{bert_mlm_detect_forward.1} parent=1 // pred_check_branch
      %27 = sbr.rel (0) target = $region21
    $region20: #{bert_mlm_detect_forward.1} parent=1 // pred_region
      _
    $region21: #{bert_mlm_detect_forward.1} parent=1 // pred_fallthru
      _
    // Predicated region
    $region22: #{bert_mlm_detect_forward.1} parent=1 // pred_check
      _
    $region23: #{bert_mlm_detect_forward.1} parent=1 // pred_check_branch
      %29 = sbr.rel (0) target = $region25
    $region24: #{bert_mlm_detect_forward.1} parent=1 // pred_region
      _
    $region25: #{bert_mlm_detect_forward.1} parent=1 // pred_fallthru
      _
    // Predicated region
    $region26: #{bert_mlm_detect_forward.1} parent=1 // pred_check
      _
    $region27: #{bert_mlm_detect_forward.1} parent=1 // pred_check_branch
      %31 = sbr.rel (0) target = $region29
    $region28: #{bert_mlm_detect_forward.1} parent=1 // pred_region
      _
    $region29: #{bert_mlm_detect_forward.1} parent=1 // pred_fallthru
      _
    // Predicated region
    $region30: #{bert_mlm_detect_forward.1} parent=1 // pred_check
      _
    $region31: #{bert_mlm_detect_forward.1} parent=1 // pred_check_branch
      %33 = sbr.rel (0) target = $region33
    $region32: #{bert_mlm_detect_forward.1} parent=1 // pred_region
      _
    $region33: #{bert_mlm_detect_forward.1} parent=1 // pred_fallthru
      _
    // Predicated region
    $region34: #{bert_mlm_detect_forward.1} parent=1 // pred_check
      _
    $region35: #{bert_mlm_detect_forward.1} parent=1 // pred_check_branch
      %35 = sbr.rel (0) target = $region37
    $region36: #{bert_mlm_detect_forward.1} parent=1 // pred_region
      _
    $region37: #{bert_mlm_detect_forward.1} parent=1 // pred_fallthru
      _
    %v36 = vld [vmem:[%s2] sm:$0xff]
    %v37 = vld [vmem:[%s2 + $0x8] sm:$0xff]
    %v38 = vld [vmem:[%s2 + $0x10] sm:$0xff]
    %v39 = vld [vmem:[%s1] sm:$0xff]
    %v40 = vld [vmem:[%s1 + $0x8] sm:$0xff]
    %v41 = vld [vmem:[%s1 + $0x10] sm:$0xff]
    %v42 = vld [vmem:[%s1 + $0x18] sm:$0xff]
    %v43 = vld [vmem:[%s0] sm:$0xff]
    %v44 = vld [vmem:[%s0 + $0x8] sm:$0xff]
    %vm45 = vcmask 261120
    %v46 = vsel %vm45, %v43, 0.0
    %47 = vadd.xlane.f32.xlu0 %v46
    %v48 = vpop.xlane.xlu0 %47
    %v49 = vsel %vm45, %v44, 0.0
    %50 = vadd.xlane.f32.xlu0 %v49
    %v51 = vpop.xlane.xlu0 %50
    %v52 = vrcp.pop 32.0
    %v53 = vmul.f32 32.0, %v52
    %v54 = vsub.f32 1.0, %v53
    %v55 = vmul.f32 %v52, %v54
    %v56 = vadd.f32 %v52, %v55
    %vm57 = vweird.f32 %v52
    %v58 = vsel %vm57, %v52, %v56
    %v59 = vmul.f32 %v48, %v58
    %v60 = vmul.f32 %v51, %v58
    %v61 = vsub.f32 %v43, %v59
    %v62 = vsub.f32 %v44, %v60
    %v63 = vmul.f32 %v61, %v61
    %v64 = vmul.f32 %v62, %v62
    %v65 = vsel %vm45, %v63, 0.0
    %66 = vadd.xlane.f32.xlu0 %v65
    %v67 = vpop.xlane.xlu0 %66
    %v68 = vsel %vm45, %v64, 0.0
    %69 = vadd.xlane.f32.xlu0 %v68
    %v70 = vpop.xlane.xlu0 %69
    %v71 = vmul.f32 %v67, %v58
    %v72 = vmul.f32 %v70, %v58
    %v73 = vadd.f32 %v71, 1e-12
    %v74 = vadd.f32 %v72, 1e-12
    %v75 = vrsqrt.pop %v73
    %v76 = vmul.f32 %v75, %v73
    %v77 = vmul.f32 %v76, %v75
    %v78 = vmul.f32 0.5, %v77
    %v79 = vsub.f32 1.5, %v78
    %v80 = vmul.f32 %v75, %v79
    %vm81 = vweird.f32 %v73
    %vm82 = vweird.f32 %v75
    %vm83 = vmor %vm81, %vm82
    %v84 = vsel %vm83, %v75, %v80
    %v85 = vrsqrt.pop %v74
    %v86 = vmul.f32 %v85, %v74
    %v87 = vmul.f32 %v86, %v85
    %v88 = vmul.f32 0.5, %v87
    %v89 = vsub.f32 1.5, %v88
    %v90 = vmul.f32 %v85, %v89
    %vm91 = vweird.f32 %v74
    %vm92 = vweird.f32 %v85
    %vm93 = vmor %vm91, %vm92
    %v94 = vsel %vm93, %v85, %v90
    %v95 = vmul.f32 %v61, %v84
    %v96 = vmul.f32 %v62, %v94
    %v97 = vperm.slane %v36, 0
    %v98 = vmul.f32 %v95, %v97
    %v99 = vmul.f32 %v96, %v97
    %v100 = vperm.slane %v36, 1
    %v101 = vadd.f32 %v98, %v100
    %v102 = vadd.f32 %v99, %v100
    %v103 = vld [vmem:[%s3] sm:$0xff]
    %v104 = vld [vmem:[%s3 + $0x8] sm:$0xff]
    %v105 = vld [vmem:[%s3 + $0x10] sm:$0xff]
    %v106 = vld [vmem:[%s3 + $0x18] sm:$0xff]
    %v107 = vperm.slane %v37, 0
    %v109 = vsel %vm45, %v101, 0
    %v112 = vsel %vm45, %v102, 0
    %114 = vmatpush.msra.mxu0 0.0
    %115 = vmatpush.msra.mxu0 0.0
    %116 = vmatpush.msra.mxu0 0.0
    %117 = vmatpush.msra.mxu0 0.0
    %118 = vmatpush.msra.mxu0 0.0
    %119 = vmatpush.msra.mxu0 0.0
    %120 = vmatpush.msra.mxu0 0.0
    %121 = vmatpush.msra.mxu0 0.0
    %122 = vmatpush.msra.mxu0 0.0
    %123 = vmatpush.msra.mxu0 0.0
    %124 = vmatpush.msra.mxu0 0.0
    %125 = vmatpush.msra.mxu0 0.0
    %126 = vmatpush.msra.mxu0 %v106
    %127 = vmatpush.msra.mxu0 %v105
    %128 = vmatpush.msra.mxu0 %v104
    %129 = vmatpush.msra.mxu0 %v103
    %130 = vmatmul.f32.gmra.mxu0 %v109
    %v131 = vpop.f32.mrf.mxu0
    %v132 = vadd.f32 %v107, %v131
    %133 = vmatmul.f32.gmra.mxu0 %v112
    %v134 = vpop.f32.mrf.mxu0
    %v135 = vadd.f32 %v107, %v134
    %136 = vdwg.mxu0
    %v137 = vmul.f32 %v132, 0.25
    %v138 = vmul.f32 %v135, 0.25
    %v139 = vperm.slane %v41, 0
    %141 = vrot.lane.b32.xlu0 %v132, 96
    %v142 = vpop.permute.xlu0 %141
    %144 = vrot.lane.b32.xlu0 %v139, 120
    %v145 = vpop.permute.xlu0 %144
    %vm147 = vcmask 130048
    %v149 = vsel %vm147, %v137, 0
    %v151 = vsel %vm147, %v142, 0
    %153 = vmatpush.xpose.msra.mxu0 0.0
    %154 = vmatpush.xpose.msra.mxu0 0.0
    %155 = vmatpush.xpose.msra.mxu0 0.0
    %156 = vmatpush.xpose.msra.mxu0 0.0
    %157 = vmatpush.xpose.msra.mxu0 0.0
    %158 = vmatpush.xpose.msra.mxu0 0.0
    %159 = vmatpush.xpose.msra.mxu0 0.0
    %160 = vmatpush.xpose.msra.mxu0 0.0
    %161 = vmatpush.xpose.msra.mxu0 0.0
    %162 = vmatpush.xpose.msra.mxu0 0.0
    %163 = vmatpush.xpose.msra.mxu0 0.0
    %164 = vmatpush.xpose.msra.mxu0 0.0
    %165 = vmatpush.xpose.msra.mxu0 0.0
    %166 = vmatpush.xpose.msra.mxu0 0.0
    %167 = vmatpush.xpose.msra.mxu0 0.0
    %168 = vmatpush.xpose.msra.mxu0 %v151
    %169 = vmatmul.f32.gmra.mxu0 %v149
    %v170 = vpop.f32.mrf.mxu0
    %v171 = vadd.f32 %v145, %v170
    %172 = vdwg.mxu0
    %vm173 = vcmask 64512
    %v174 = vsel %vm173, %v171, -inf
    %175 = vmax.xlane.f32.xlu0 %v174
    %v176 = vpop.xlane.xlu0 %175
    %v177 = vsub.f32 %v171, %v176
    %v178 = vmul.f32 %v177, 1.442695
    %v179 = vpow.pop %v178
    %v180 = vsel %vm173, %v179, 0.0
    %181 = vadd.xlane.f32.xlu0 %v180
    %v182 = vpop.xlane.xlu0 %181
    %v183 = vrcp.pop %v182
    %v184 = vmul.f32 %v179, %v183
    %185 = vrot.lane.b32.xlu0 %v132, 64
    %v186 = vpop.permute.xlu0 %185
    %v189 = vsel %vm173, %v184, 0
    %191 = vmatpush.msra.mxu0 0.0
    %192 = vmatpush.msra.mxu0 0.0
    %193 = vmatpush.msra.mxu0 0.0
    %194 = vmatpush.msra.mxu0 0.0
    %195 = vmatpush.msra.mxu0 0.0
    %196 = vmatpush.msra.mxu0 0.0
    %197 = vmatpush.msra.mxu0 0.0
    %198 = vmatpush.msra.mxu0 0.0
    %199 = vmatpush.msra.mxu0 0.0
    %200 = vmatpush.msra.mxu0 0.0
    %201 = vmatpush.msra.mxu0 0.0
    %202 = vmatpush.msra.mxu0 0.0
    %203 = vmatpush.msra.mxu0 0.0
    %204 = vmatpush.msra.mxu0 0.0
    %205 = vmatpush.msra.mxu0 0.0
    %206 = vmatpush.msra.mxu0 %v186
    %207 = vmatmul.f32.gmra.mxu0 %v189
    %v208 = vpop.f32.mrf.mxu0
    %v209 = vadd.f32 0.0, %v208
    %210 = vdwg.mxu0
    %211 = vrot.lane.b32.xlu0 %v137, 112
    %v212 = vpop.permute.xlu0 %211
    %213 = vrot.lane.b32.xlu0 %v132, 80
    %v214 = vpop.permute.xlu0 %213
    %v215 = vsel %vm147, %v212, 0
    %v217 = vsel %vm147, %v214, 0
    %219 = vmatpush.xpose.msra.mxu0 0.0
    %220 = vmatpush.xpose.msra.mxu0 0.0
    %221 = vmatpush.xpose.msra.mxu0 0.0
    %222 = vmatpush.xpose.msra.mxu0 0.0
    %223 = vmatpush.xpose.msra.mxu0 0.0
    %224 = vmatpush.xpose.msra.mxu0 0.0
    %225 = vmatpush.xpose.msra.mxu0 0.0
    %226 = vmatpush.xpose.msra.mxu0 0.0
    %227 = vmatpush.xpose.msra.mxu0 0.0
    %228 = vmatpush.xpose.msra.mxu0 0.0
    %229 = vmatpush.xpose.msra.mxu0 0.0
    %230 = vmatpush.xpose.msra.mxu0 0.0
    %231 = vmatpush.xpose.msra.mxu0 0.0
    %232 = vmatpush.xpose.msra.mxu0 0.0
    %233 = vmatpush.xpose.msra.mxu0 0.0
    %234 = vmatpush.xpose.msra.mxu0 %v217
    %235 = vmatmul.f32.gmra.mxu0 %v215
    %v236 = vpop.f32.mrf.mxu0
    %v237 = vadd.f32 %v145, %v236
    %238 = vdwg.mxu0
    %v239 = vsel %vm173, %v237, -inf
    %240 = vmax.xlane.f32.xlu0 %v239
    %v241 = vpop.xlane.xlu0 %240
    %v242 = vsub.f32 %v237, %v241
    %v243 = vmul.f32 %v242, 1.442695
    %v244 = vpow.pop %v243
    %v245 = vsel %vm173, %v244, 0.0
    %246 = vadd.xlane.f32.xlu0 %v245
    %v247 = vpop.xlane.xlu0 %246
    %v248 = vrcp.pop %v247
    %v249 = vmul.f32 %v244, %v248
    %250 = vrot.lane.b32.xlu0 %v132, 48
    %v251 = vpop.permute.xlu0 %250
    %v254 = vsel %vm173, %v249, 0
    %256 = vmatpush.msra.mxu0 0.0
    %257 = vmatpush.msra.mxu0 0.0
    %258 = vmatpush.msra.mxu0 0.0
    %259 = vmatpush.msra.mxu0 0.0
    %260 = vmatpush.msra.mxu0 0.0
    %261 = vmatpush.msra.mxu0 0.0
    %262 = vmatpush.msra.mxu0 0.0
    %263 = vmatpush.msra.mxu0 0.0
    %264 = vmatpush.msra.mxu0 0.0
    %265 = vmatpush.msra.mxu0 0.0
    %266 = vmatpush.msra.mxu0 0.0
    %267 = vmatpush.msra.mxu0 0.0
    %268 = vmatpush.msra.mxu0 0.0
    %269 = vmatpush.msra.mxu0 0.0
    %270 = vmatpush.msra.mxu0 0.0
    %271 = vmatpush.msra.mxu0 %v251
    %272 = vmatmul.f32.gmra.mxu0 %v254
    %v273 = vpop.f32.mrf.mxu0
    %v274 = vadd.f32 0.0, %v273
    %275 = vdwg.mxu0
    %277 = vrot.lane.b32.xlu0 %v274, 16
    %v278 = vpop.permute.xlu0 %277
    %v280 = vsel %vm147, %v209, %v278
    %v281 = vperm.slane %v42, 0
    %283 = vrot.lane.b32.xlu0 %v135, 96
    %v284 = vpop.permute.xlu0 %283
    %286 = vrot.lane.b32.xlu0 %v281, 120
    %v287 = vpop.permute.xlu0 %286
    %v290 = vsel %vm147, %v138, 0
    %v292 = vsel %vm147, %v284, 0
    %294 = vmatpush.xpose.msra.mxu0 0.0
    %295 = vmatpush.xpose.msra.mxu0 0.0
    %296 = vmatpush.xpose.msra.mxu0 0.0
    %297 = vmatpush.xpose.msra.mxu0 0.0
    %298 = vmatpush.xpose.msra.mxu0 0.0
    %299 = vmatpush.xpose.msra.mxu0 0.0
    %300 = vmatpush.xpose.msra.mxu0 0.0
    %301 = vmatpush.xpose.msra.mxu0 0.0
    %302 = vmatpush.xpose.msra.mxu0 0.0
    %303 = vmatpush.xpose.msra.mxu0 0.0
    %304 = vmatpush.xpose.msra.mxu0 0.0
    %305 = vmatpush.xpose.msra.mxu0 0.0
    %306 = vmatpush.xpose.msra.mxu0 0.0
    %307 = vmatpush.xpose.msra.mxu0 0.0
    %308 = vmatpush.xpose.msra.mxu0 0.0
    %309 = vmatpush.xpose.msra.mxu0 %v292
    %310 = vmatmul.f32.gmra.mxu0 %v290
    %v311 = vpop.f32.mrf.mxu0
    %v312 = vadd.f32 %v287, %v311
    %313 = vdwg.mxu0
    %v314 = vsel %vm173, %v312, -inf
    %315 = vmax.xlane.f32.xlu0 %v314
    %v316 = vpop.xlane.xlu0 %315
    %v317 = vsub.f32 %v312, %v316
    %v318 = vmul.f32 %v317, 1.442695
    %v319 = vpow.pop %v318
    %v320 = vsel %vm173, %v319, 0.0
    %321 = vadd.xlane.f32.xlu0 %v320
    %v322 = vpop.xlane.xlu0 %321
    %v323 = vrcp.pop %v322
    %v324 = vmul.f32 %v319, %v323
    %325 = vrot.lane.b32.xlu0 %v135, 64
    %v326 = vpop.permute.xlu0 %325
    %v329 = vsel %vm173, %v324, 0
    %331 = vmatpush.msra.mxu0 0.0
    %332 = vmatpush.msra.mxu0 0.0
    %333 = vmatpush.msra.mxu0 0.0
    %334 = vmatpush.msra.mxu0 0.0
    %335 = vmatpush.msra.mxu0 0.0
    %336 = vmatpush.msra.mxu0 0.0
    %337 = vmatpush.msra.mxu0 0.0
    %338 = vmatpush.msra.mxu0 0.0
    %339 = vmatpush.msra.mxu0 0.0
    %340 = vmatpush.msra.mxu0 0.0
    %341 = vmatpush.msra.mxu0 0.0
    %342 = vmatpush.msra.mxu0 0.0
    %343 = vmatpush.msra.mxu0 0.0
    %344 = vmatpush.msra.mxu0 0.0
    %345 = vmatpush.msra.mxu0 0.0
    %346 = vmatpush.msra.mxu0 %v326
    %347 = vmatmul.f32.gmra.mxu0 %v329
    %v348 = vpop.f32.mrf.mxu0
    %v349 = vadd.f32 0.0, %v348
    %350 = vdwg.mxu0
    %351 = vrot.lane.b32.xlu0 %v138, 112
    %v352 = vpop.permute.xlu0 %351
    %353 = vrot.lane.b32.xlu0 %v135, 80
    %v354 = vpop.permute.xlu0 %353
    %v355 = vsel %vm147, %v352, 0
    %v357 = vsel %vm147, %v354, 0
    %359 = vmatpush.xpose.msra.mxu0 0.0
    %360 = vmatpush.xpose.msra.mxu0 0.0
    %361 = vmatpush.xpose.msra.mxu0 0.0
    %362 = vmatpush.xpose.msra.mxu0 0.0
    %363 = vmatpush.xpose.msra.mxu0 0.0
    %364 = vmatpush.xpose.msra.mxu0 0.0
    %365 = vmatpush.xpose.msra.mxu0 0.0
    %366 = vmatpush.xpose.msra.mxu0 0.0
    %367 = vmatpush.xpose.msra.mxu0 0.0
    %368 = vmatpush.xpose.msra.mxu0 0.0
    %369 = vmatpush.xpose.msra.mxu0 0.0
    %370 = vmatpush.xpose.msra.mxu0 0.0
    %371 = vmatpush.xpose.msra.mxu0 0.0
    %372 = vmatpush.xpose.msra.mxu0 0.0
    %373 = vmatpush.xpose.msra.mxu0 0.0
    %374 = vmatpush.xpose.msra.mxu0 %v357
    %375 = vmatmul.f32.gmra.mxu0 %v355
    %v376 = vpop.f32.mrf.mxu0
    %v377 = vadd.f32 %v287, %v376
    %378 = vdwg.mxu0
    %v379 = vsel %vm173, %v377, -inf
    %380 = vmax.xlane.f32.xlu0 %v379
    %v381 = vpop.xlane.xlu0 %380
    %v382 = vsub.f32 %v377, %v381
    %v383 = vmul.f32 %v382, 1.442695
    %v384 = vpow.pop %v383
    %v385 = vsel %vm173, %v384, 0.0
    %386 = vadd.xlane.f32.xlu0 %v385
    %v387 = vpop.xlane.xlu0 %386
    %v388 = vrcp.pop %v387
    %v389 = vmul.f32 %v384, %v388
    %390 = vrot.lane.b32.xlu0 %v135, 48
    %v391 = vpop.permute.xlu0 %390
    %v394 = vsel %vm173, %v389, 0
    %396 = vmatpush.msra.mxu0 0.0
    %397 = vmatpush.msra.mxu0 0.0
    %398 = vmatpush.msra.mxu0 0.0
    %399 = vmatpush.msra.mxu0 0.0
    %400 = vmatpush.msra.mxu0 0.0
    %401 = vmatpush.msra.mxu0 0.0
    %402 = vmatpush.msra.mxu0 0.0
    %403 = vmatpush.msra.mxu0 0.0
    %404 = vmatpush.msra.mxu0 0.0
    %405 = vmatpush.msra.mxu0 0.0
    %406 = vmatpush.msra.mxu0 0.0
    %407 = vmatpush.msra.mxu0 0.0
    %408 = vmatpush.msra.mxu0 0.0
    %409 = vmatpush.msra.mxu0 0.0
    %410 = vmatpush.msra.mxu0 0.0
    %411 = vmatpush.msra.mxu0 %v391
    %412 = vmatmul.f32.gmra.mxu0 %v394
    %v413 = vpop.f32.mrf.mxu0
    %v414 = vadd.f32 0.0, %v413
    %415 = vdwg.mxu0
    %417 = vrot.lane.b32.xlu0 %v414, 16
    %v418 = vpop.permute.xlu0 %417
    %v420 = vsel %vm147, %v349, %v418
    %v421 = vld [vmem:[%s4] sm:$0xff]
    %v422 = vld [vmem:[%s4 + $0x8] sm:$0xff]
    %v423 = vld [vmem:[%s4 + $0x10] sm:$0xff]
    %v424 = vld [vmem:[%s4 + $0x18] sm:$0xff]
    %v425 = vperm.slane %v37, 1
    %v427 = vsel %vm45, %v280, 0
    %v430 = vsel %vm45, %v420, 0
    %432 = vmatpush.msra.mxu0 0.0
    %433 = vmatpush.msra.mxu0 0.0
    %434 = vmatpush.msra.mxu0 0.0
    %435 = vmatpush.msra.mxu0 0.0
    %436 = vmatpush.msra.mxu0 0.0
    %437 = vmatpush.msra.mxu0 0.0
    %438 = vmatpush.msra.mxu0 0.0
    %439 = vmatpush.msra.mxu0 0.0
    %440 = vmatpush.msra.mxu0 0.0
    %441 = vmatpush.msra.mxu0 0.0
    %442 = vmatpush.msra.mxu0 0.0
    %443 = vmatpush.msra.mxu0 0.0
    %444 = vmatpush.msra.mxu0 %v424
    %445 = vmatpush.msra.mxu0 %v423
    %446 = vmatpush.msra.mxu0 %v422
    %447 = vmatpush.msra.mxu0 %v421
    %448 = vmatmul.f32.gmra.mxu0 %v427
    %v449 = vpop.f32.mrf.mxu0
    %v450 = vadd.f32 %v425, %v449
    %451 = vmatmul.f32.gmra.mxu0 %v430
    %v452 = vpop.f32.mrf.mxu0
    %v453 = vadd.f32 %v425, %v452
    %454 = vdwg.mxu0
    %v455 = vadd.f32 %v101, %v450
    %v456 = vadd.f32 %v102, %v453
    %v457 = vsel %vm45, %v455, 0.0
    %458 = vadd.xlane.f32.xlu0 %v457
    %v459 = vpop.xlane.xlu0 %458
    %v460 = vsel %vm45, %v456, 0.0
    %461 = vadd.xlane.f32.xlu0 %v460
    %v462 = vpop.xlane.xlu0 %461
    %v463 = vmul.f32 %v459, %v58
    %v464 = vmul.f32 %v462, %v58
    %v465 = vsub.f32 %v455, %v463
    %v466 = vsub.f32 %v456, %v464
    %v467 = vmul.f32 %v465, %v465
    %v468 = vmul.f32 %v466, %v466
    %v469 = vsel %vm45, %v467, 0.0
    %470 = vadd.xlane.f32.xlu0 %v469
    %v471 = vpop.xlane.xlu0 %470
    %v472 = vsel %vm45, %v468, 0.0
    %473 = vadd.xlane.f32.xlu0 %v472
    %v474 = vpop.xlane.xlu0 %473
    %v475 = vmul.f32 %v471, %v58
    %v476 = vmul.f32 %v474, %v58
    %v477 = vadd.f32 %v475, 1e-12
    %v478 = vadd.f32 %v476, 1e-12
    %v479 = vrsqrt.pop %v477
    %v480 = vmul.f32 %v479, %v477
    %v481 = vmul.f32 %v480, %v479
    %v482 = vmul.f32 0.5, %v481
    %v483 = vsub.f32 1.5, %v482
    %v484 = vmul.f32 %v479, %v483
    %vm485 = vweird.f32 %v477
    %vm486 = vweird.f32 %v479
    %vm487 = vmor %vm485, %vm486
    %v488 = vsel %vm487, %v479, %v484
    %v489 = vrsqrt.pop %v478
    %v490 = vmul.f32 %v489, %v478
    %v491 = vmul.f32 %v490, %v489
    %v492 = vmul.f32 0.5, %v491
    %v493 = vsub.f32 1.5, %v492
    %v494 = vmul.f32 %v489, %v493
    %vm495 = vweird.f32 %v478
    %vm496 = vweird.f32 %v489
    %vm497 = vmor %vm495, %vm496
    %v498 = vsel %vm497, %v489, %v494
    %v499 = vmul.f32 %v465, %v488
    %v500 = vmul.f32 %v466, %v498
    %v501 = vperm.slane %v37, 2
    %v502 = vmul.f32 %v499, %v501
    %v503 = vmul.f32 %v500, %v501
    %v504 = vperm.slane %v37, 3
    %v505 = vadd.f32 %v502, %v504
    %v506 = vadd.f32 %v503, %v504
    %v507 = vld [vmem:[%s5] sm:$0xff]
    %v508 = vld [vmem:[%s5 + $0x8] sm:$0xff]
    %v509 = vld [vmem:[%s5 + $0x10] sm:$0xff]
    %v510 = vld [vmem:[%s5 + $0x18] sm:$0xff]
    %v511 = vperm.slane %v37, 4
    %v513 = vsel %vm45, %v505, 0
    %v516 = vsel %vm45, %v506, 0
    %518 = vmatpush.msra.mxu0 0.0
    %519 = vmatpush.msra.mxu0 0.0
    %520 = vmatpush.msra.mxu0 0.0
    %521 = vmatpush.msra.mxu0 0.0
    %522 = vmatpush.msra.mxu0 0.0
    %523 = vmatpush.msra.mxu0 0.0
    %524 = vmatpush.msra.mxu0 0.0
    %525 = vmatpush.msra.mxu0 0.0
    %526 = vmatpush.msra.mxu0 0.0
    %527 = vmatpush.msra.mxu0 0.0
    %528 = vmatpush.msra.mxu0 0.0
    %529 = vmatpush.msra.mxu0 0.0
    %530 = vmatpush.msra.mxu0 %v510
    %531 = vmatpush.msra.mxu0 %v509
    %532 = vmatpush.msra.mxu0 %v508
    %533 = vmatpush.msra.mxu0 %v507
    %534 = vmatmul.f32.gmra.mxu0 %v513
    %v535 = vpop.f32.mrf.mxu0
    %v536 = vadd.f32 %v511, %v535
    %537 = vmatmul.f32.gmra.mxu0 %v516
    %v538 = vpop.f32.mrf.mxu0
    %v539 = vadd.f32 %v511, %v538
    %540 = vdwg.mxu0
    %v541 = vmul.f32 %v536, 0.5
    %v542 = vmul.f32 %v539, 0.5
    %v543 = vmul.f32 %v536, 0.044715
    %v544 = vmul.f32 %v539, 0.044715
    %v545 = vmul.f32 %v543, %v536
    %v546 = vmul.f32 %v544, %v539
    %v547 = vmul.f32 %v545, %v536
    %v548 = vmul.f32 %v546, %v539
    %v549 = vadd.f32 %v536, %v547
    %v550 = vadd.f32 %v539, %v548
    %v551 = vmul.f32 %v549, 0.7978846
    %v552 = vmul.f32 %v550, 0.7978846
    %v553 = vtanh.pop %v551
    %v554 = vtanh.pop %v552
    %v555 = vadd.f32 %v553, 1.0
    %v556 = vadd.f32 %v554, 1.0
    %v557 = vmul.f32 %v541, %v555
    %v558 = vmul.f32 %v542, %v556
    %v559 = vld [vmem:[%s6] sm:$0xff]
    %v560 = vld [vmem:[%s6 + $0x8] sm:$0xff]
    %v561 = vld [vmem:[%s6 + $0x10] sm:$0xff]
    %v562 = vld [vmem:[%s6 + $0x18] sm:$0xff]
    %v563 = vld [vmem:[%s6 + $0x20] sm:$0xff]
    %v564 = vld [vmem:[%s6 + $0x28] sm:$0xff]
    %v565 = vld [vmem:[%s6 + $0x30] sm:$0xff]
    %v566 = vld [vmem:[%s6 + $0x38] sm:$0xff]
    %v567 = vperm.slane %v37, 5
    %vm568 = vcmask 523264
    %v570 = vsel %vm568, %v557, 0
    %v573 = vsel %vm568, %v558, 0
    %575 = vmatpush.msra.mxu0 0.0
    %576 = vmatpush.msra.mxu0 0.0
    %577 = vmatpush.msra.mxu0 0.0
    %578 = vmatpush.msra.mxu0 0.0
    %579 = vmatpush.msra.mxu0 0.0
    %580 = vmatpush.msra.mxu0 0.0
    %581 = vmatpush.msra.mxu0 0.0
    %582 = vmatpush.msra.mxu0 0.0
    %583 = vmatpush.msra.mxu0 %v566
    %584 = vmatpush.msra.mxu0 %v565
    %585 = vmatpush.msra.mxu0 %v564
    %586 = vmatpush.msra.mxu0 %v563
    %587 = vmatpush.msra.mxu0 %v562
    %588 = vmatpush.msra.mxu0 %v561
    %589 = vmatpush.msra.mxu0 %v560
    %590 = vmatpush.msra.mxu0 %v559
    %591 = vmatmul.f32.gmra.mxu0 %v570
    %v592 = vpop.f32.mrf.mxu0
    %v593 = vadd.f32 %v567, %v592
    %594 = vmatmul.f32.gmra.mxu0 %v573
    %v595 = vpop.f32.mrf.mxu0
    %v596 = vadd.f32 %v567, %v595
    %597 = vdwg.mxu0
    %v598 = vadd.f32 %v505, %v593
    %v599 = vadd.f32 %v506, %v596
    %v600 = vsel %vm45, %v598, 0.0
    %601 = vadd.xlane.f32.xlu0 %v600
    %v602 = vpop.xlane.xlu0 %601
    %v603 = vsel %vm45, %v599, 0.0
    %604 = vadd.xlane.f32.xlu0 %v603
    %v605 = vpop.xlane.xlu0 %604
    %v606 = vmul.f32 %v602, %v58
    %v607 = vmul.f32 %v605, %v58
    %v608 = vsub.f32 %v598, %v606
    %v609 = vsub.f32 %v599, %v607
    %v610 = vmul.f32 %v608, %v608
    %v611 = vmul.f32 %v609, %v609
    %v612 = vsel %vm45, %v610, 0.0
    %613 = vadd.xlane.f32.xlu0 %v612
    %v614 = vpop.xlane.xlu0 %613
    %v615 = vsel %vm45, %v611, 0.0
    %616 = vadd.xlane.f32.xlu0 %v615
    %v617 = vpop.xlane.xlu0 %616
    %v618 = vmul.f32 %v614, %v58
    %v619 = vmul.f32 %v617, %v58
    %v620 = vadd.f32 %v618, 1e-12
    %v621 = vadd.f32 %v619, 1e-12
    %v622 = vrsqrt.pop %v620
    %v623 = vmul.f32 %v622, %v620
    %v624 = vmul.f32 %v623, %v622
    %v625 = vmul.f32 0.5, %v624
    %v626 = vsub.f32 1.5, %v625
    %v627 = vmul.f32 %v622, %v626
    %vm628 = vweird.f32 %v620
    %vm629 = vweird.f32 %v622
    %vm630 = vmor %vm628, %vm629
    %v631 = vsel %vm630, %v622, %v627
    %v632 = vrsqrt.pop %v621
    %v633 = vmul.f32 %v632, %v621
    %v634 = vmul.f32 %v633, %v632
    %v635 = vmul.f32 0.5, %v634
    %v636 = vsub.f32 1.5, %v635
    %v637 = vmul.f32 %v632, %v636
    %vm638 = vweird.f32 %v621
    %vm639 = vweird.f32 %v632
    %vm640 = vmor %vm638, %vm639
    %v641 = vsel %vm640, %v632, %v637
    %v642 = vmul.f32 %v608, %v631
    %v643 = vmul.f32 %v609, %v641
    %v644 = vperm.slane %v37, 6
    %v645 = vmul.f32 %v642, %v644
    %v646 = vmul.f32 %v643, %v644
    %v647 = vperm.slane %v37, 7
    %v648 = vadd.f32 %v645, %v647
    %v649 = vadd.f32 %v646, %v647
    %s650 = scalar_lea.vmem %s3, 32
    %v651 = vld [vmem:[%s650] sm:$0xff]
    %v652 = vld [vmem:[%s650 + $0x8] sm:$0xff]
    %v653 = vld [vmem:[%s650 + $0x10] sm:$0xff]
    %v654 = vld [vmem:[%s650 + $0x18] sm:$0xff]
    %v655 = vperm.slane %v38, 0
    %v657 = vsel %vm45, %v648, 0
    %v660 = vsel %vm45, %v649, 0
    %662 = vmatpush.msra.mxu0 0.0
    %663 = vmatpush.msra.mxu0 0.0
    %664 = vmatpush.msra.mxu0 0.0
    %665 = vmatpush.msra.mxu0 0.0
    %666 = vmatpush.msra.mxu0 0.0
    %667 = vmatpush.msra.mxu0 0.0
    %668 = vmatpush.msra.mxu0 0.0
    %669 = vmatpush.msra.mxu0 0.0
    %670 = vmatpush.msra.mxu0 0.0
    %671 = vmatpush.msra.mxu0 0.0
    %672 = vmatpush.msra.mxu0 0.0
    %673 = vmatpush.msra.mxu0 0.0
    %674 = vmatpush.msra.mxu0 %v654
    %675 = vmatpush.msra.mxu0 %v653
    %676 = vmatpush.msra.mxu0 %v652
    %677 = vmatpush.msra.mxu0 %v651
    %678 = vmatmul.f32.gmra.mxu0 %v657
    %v679 = vpop.f32.mrf.mxu0
    %v680 = vadd.f32 %v655, %v679
    %681 = vmatmul.f32.gmra.mxu0 %v660
    %v682 = vpop.f32.mrf.mxu0
    %v683 = vadd.f32 %v655, %v682
    %684 = vdwg.mxu0
    %v685 = vmul.f32 %v680, 0.25
    %v686 = vmul.f32 %v683, 0.25
    %688 = vrot.lane.b32.xlu0 %v680, 96
    %v689 = vpop.permute.xlu0 %688
    %v691 = vsel %vm147, %v685, 0
    %v693 = vsel %vm147, %v689, 0
    %695 = vmatpush.xpose.msra.mxu0 0.0
    %696 = vmatpush.xpose.msra.mxu0 0.0
    %697 = vmatpush.xpose.msra.mxu0 0.0
    %698 = vmatpush.xpose.msra.mxu0 0.0
    %699 = vmatpush.xpose.msra.mxu0 0.0
    %700 = vmatpush.xpose.msra.mxu0 0.0
    %701 = vmatpush.xpose.msra.mxu0 0.0
    %702 = vmatpush.xpose.msra.mxu0 0.0
    %703 = vmatpush.xpose.msra.mxu0 0.0
    %704 = vmatpush.xpose.msra.mxu0 0.0
    %705 = vmatpush.xpose.msra.mxu0 0.0
    %706 = vmatpush.xpose.msra.mxu0 0.0
    %707 = vmatpush.xpose.msra.mxu0 0.0
    %708 = vmatpush.xpose.msra.mxu0 0.0
    %709 = vmatpush.xpose.msra.mxu0 0.0
    %710 = vmatpush.xpose.msra.mxu0 %v693
    %711 = vmatmul.f32.gmra.mxu0 %v691
    %v712 = vpop.f32.mrf.mxu0
    %v713 = vadd.f32 %v145, %v712
    %714 = vdwg.mxu0
    %v715 = vsel %vm173, %v713, -inf
    %716 = vmax.xlane.f32.xlu0 %v715
    %v717 = vpop.xlane.xlu0 %716
    %v718 = vsub.f32 %v713, %v717
    %v719 = vmul.f32 %v718, 1.442695
    %v720 = vpow.pop %v719
    %v721 = vsel %vm173, %v720, 0.0
    %722 = vadd.xlane.f32.xlu0 %v721
    %v723 = vpop.xlane.xlu0 %722
    %v724 = vrcp.pop %v723
    %v725 = vmul.f32 %v720, %v724
    %726 = vrot.lane.b32.xlu0 %v680, 64
    %v727 = vpop.permute.xlu0 %726
    %v730 = vsel %vm173, %v725, 0
    %732 = vmatpush.msra.mxu0 0.0
    %733 = vmatpush.msra.mxu0 0.0
    %734 = vmatpush.msra.mxu0 0.0
    %735 = vmatpush.msra.mxu0 0.0
    %736 = vmatpush.msra.mxu0 0.0
    %737 = vmatpush.msra.mxu0 0.0
    %738 = vmatpush.msra.mxu0 0.0
    %739 = vmatpush.msra.mxu0 0.0
    %740 = vmatpush.msra.mxu0 0.0
    %741 = vmatpush.msra.mxu0 0.0
    %742 = vmatpush.msra.mxu0 0.0
    %743 = vmatpush.msra.mxu0 0.0
    %744 = vmatpush.msra.mxu0 0.0
    %745 = vmatpush.msra.mxu0 0.0
    %746 = vmatpush.msra.mxu0 0.0
    %747 = vmatpush.msra.mxu0 %v727
    %748 = vmatmul.f32.gmra.mxu0 %v730
    %v749 = vpop.f32.mrf.mxu0
    %v750 = vadd.f32 0.0, %v749
    %751 = vdwg.mxu0
    %752 = vrot.lane.b32.xlu0 %v685, 112
    %v753 = vpop.permute.xlu0 %752
    %754 = vrot.lane.b32.xlu0 %v680, 80
    %v755 = vpop.permute.xlu0 %754
    %v756 = vsel %vm147, %v753, 0
    %v758 = vsel %vm147, %v755, 0
    %760 = vmatpush.xpose.msra.mxu0 0.0
    %761 = vmatpush.xpose.msra.mxu0 0.0
    %762 = vmatpush.xpose.msra.mxu0 0.0
    %763 = vmatpush.xpose.msra.mxu0 0.0
    %764 = vmatpush.xpose.msra.mxu0 0.0
    %765 = vmatpush.xpose.msra.mxu0 0.0
    %766 = vmatpush.xpose.msra.mxu0 0.0
    %767 = vmatpush.xpose.msra.mxu0 0.0
    %768 = vmatpush.xpose.msra.mxu0 0.0
    %769 = vmatpush.xpose.msra.mxu0 0.0
    %770 = vmatpush.xpose.msra.mxu0 0.0
    %771 = vmatpush.xpose.msra.mxu0 0.0
    %772 = vmatpush.xpose.msra.mxu0 0.0
    %773 = vmatpush.xpose.msra.mxu0 0.0
    %774 = vmatpush.xpose.msra.mxu0 0.0
    %775 = vmatpush.xpose.msra.mxu0 %v758
    %776 = vmatmul.f32.gmra.mxu0 %v756
    %v777 = vpop.f32.mrf.mxu0
    %v778 = vadd.f32 %v145, %v777
    %779 = vdwg.mxu0
    %v780 = vsel %vm173, %v778, -inf
    %781 = vmax.xlane.f32.xlu0 %v780
    %v782 = vpop.xlane.xlu0 %781
    %v783 = vsub.f32 %v778, %v782
    %v784 = vmul.f32 %v783, 1.442695
    %v785 = vpow.pop %v784
    %v786 = vsel %vm173, %v785, 0.0
    %787 = vadd.xlane.f32.xlu0 %v786
    %v788 = vpop.xlane.xlu0 %787
    %v789 = vrcp.pop %v788
    %v790 = vmul.f32 %v785, %v789
    %791 = vrot.lane.b32.xlu0 %v680, 48
    %v792 = vpop.permute.xlu0 %791
    %v795 = vsel %vm173, %v790, 0
    %797 = vmatpush.msra.mxu0 0.0
    %798 = vmatpush.msra.mxu0 0.0
    %799 = vmatpush.msra.mxu0 0.0
    %800 = vmatpush.msra.mxu0 0.0
    %801 = vmatpush.msra.mxu0 0.0
    %802 = vmatpush.msra.mxu0 0.0
    %803 = vmatpush.msra.mxu0 0.0
    %804 = vmatpush.msra.mxu0 0.0
    %805 = vmatpush.msra.mxu0 0.0
    %806 = vmatpush.msra.mxu0 0.0
    %807 = vmatpush.msra.mxu0 0.0
    %808 = vmatpush.msra.mxu0 0.0
    %809 = vmatpush.msra.mxu0 0.0
    %810 = vmatpush.msra.mxu0 0.0
    %811 = vmatpush.msra.mxu0 0.0
    %812 = vmatpush.msra.mxu0 %v792
    %813 = vmatmul.f32.gmra.mxu0 %v795
    %v814 = vpop.f32.mrf.mxu0
    %v815 = vadd.f32 0.0, %v814
    %816 = vdwg.mxu0
    %818 = vrot.lane.b32.xlu0 %v815, 16
    %v819 = vpop.permute.xlu0 %818
    %v821 = vsel %vm147, %v750, %v819
    %823 = vrot.lane.b32.xlu0 %v683, 96
    %v824 = vpop.permute.xlu0 %823
    %v826 = vsel %vm147, %v686, 0
    %v828 = vsel %vm147, %v824, 0
    %830 = vmatpush.xpose.msra.mxu0 0.0
    %831 = vmatpush.xpose.msra.mxu0 0.0
    %832 = vmatpush.xpose.msra.mxu0 0.0
    %833 = vmatpush.xpose.msra.mxu0 0.0
    %834 = vmatpush.xpose.msra.mxu0 0.0
    %835 = vmatpush.xpose.msra.mxu0 0.0
    %836 = vmatpush.xpose.msra.mxu0 0.0
    %837 = vmatpush.xpose.msra.mxu0 0.0
    %838 = vmatpush.xpose.msra.mxu0 0.0
    %839 = vmatpush.xpose.msra.mxu0 0.0
    %840 = vmatpush.xpose.msra.mxu0 0.0
    %841 = vmatpush.xpose.msra.mxu0 0.0
    %842 = vmatpush.xpose.msra.mxu0 0.0
    %843 = vmatpush.xpose.msra.mxu0 0.0
    %844 = vmatpush.xpose.msra.mxu0 0.0
    %845 = vmatpush.xpose.msra.mxu0 %v828
    %846 = vmatmul.f32.gmra.mxu0 %v826
    %v847 = vpop.f32.mrf.mxu0
    %v848 = vadd.f32 %v287, %v847
    %849 = vdwg.mxu0
    %v850 = vsel %vm173, %v848, -inf
    %851 = vmax.xlane.f32.xlu0 %v850
    %v852 = vpop.xlane.xlu0 %851
    %v853 = vsub.f32 %v848, %v852
    %v854 = vmul.f32 %v853, 1.442695
    %v855 = vpow.pop %v854
    %v856 = vsel %vm173, %v855, 0.0
    %857 = vadd.xlane.f32.xlu0 %v856
    %v858 = vpop.xlane.xlu0 %857
    %v859 = vrcp.pop %v858
    %v860 = vmul.f32 %v855, %v859
    %861 = vrot.lane.b32.xlu0 %v683, 64
    %v862 = vpop.permute.xlu0 %861
    %v865 = vsel %vm173, %v860, 0
    %867 = vmatpush.msra.mxu0 0.0
    %868 = vmatpush.msra.mxu0 0.0
    %869 = vmatpush.msra.mxu0 0.0
    %870 = vmatpush.msra.mxu0 0.0
    %871 = vmatpush.msra.mxu0 0.0
    %872 = vmatpush.msra.mxu0 0.0
    %873 = vmatpush.msra.mxu0 0.0
    %874 = vmatpush.msra.mxu0 0.0
    %875 = vmatpush.msra.mxu0 0.0
    %876 = vmatpush.msra.mxu0 0.0
    %877 = vmatpush.msra.mxu0 0.0
    %878 = vmatpush.msra.mxu0 0.0
    %879 = vmatpush.msra.mxu0 0.0
    %880 = vmatpush.msra.mxu0 0.0
    %881 = vmatpush.msra.mxu0 0.0
    %882 = vmatpush.msra.mxu0 %v862
    %883 = vmatmul.f32.gmra.mxu0 %v865
    %v884 = vpop.f32.mrf.mxu0
    %v885 = vadd.f32 0.0, %v884
    %886 = vdwg.mxu0
    %887 = vrot.lane.b32.xlu0 %v686, 112
    %v888 = vpop.permute.xlu0 %887
    %889 = vrot.lane.b32.xlu0 %v683, 80
    %v890 = vpop.permute.xlu0 %889
    %v891 = vsel %vm147, %v888, 0
    %v893 = vsel %vm147, %v890, 0
    %895 = vmatpush.xpose.msra.mxu0 0.0
    %896 = vmatpush.xpose.msra.mxu0 0.0
    %897 = vmatpush.xpose.msra.mxu0 0.0
    %898 = vmatpush.xpose.msra.mxu0 0.0
    %899 = vmatpush.xpose.msra.mxu0 0.0
    %900 = vmatpush.xpose.msra.mxu0 0.0
    %901 = vmatpush.xpose.msra.mxu0 0.0
    %902 = vmatpush.xpose.msra.mxu0 0.0
    %903 = vmatpush.xpose.msra.mxu0 0.0
    %904 = vmatpush.xpose.msra.mxu0 0.0
    %905 = vmatpush.xpose.msra.mxu0 0.0
    %906 = vmatpush.xpose.msra.mxu0 0.0
    %907 = vmatpush.xpose.msra.mxu0 0.0
    %908 = vmatpush.xpose.msra.mxu0 0.0
    %909 = vmatpush.xpose.msra.mxu0 0.0
    %910 = vmatpush.xpose.msra.mxu0 %v893
    %911 = vmatmul.f32.gmra.mxu0 %v891
    %v912 = vpop.f32.mrf.mxu0
    %v913 = vadd.f32 %v287, %v912
    %914 = vdwg.mxu0
    %v915 = vsel %vm173, %v913, -inf
    %916 = vmax.xlane.f32.xlu0 %v915
    %v917 = vpop.xlane.xlu0 %916
    %v918 = vsub.f32 %v913, %v917
    %v919 = vmul.f32 %v918, 1.442695
    %v920 = vpow.pop %v919
    %v921 = vsel %vm173, %v920, 0.0
    %922 = vadd.xlane.f32.xlu0 %v921
    %v923 = vpop.xlane.xlu0 %922
    %v924 = vrcp.pop %v923
    %v925 = vmul.f32 %v920, %v924
    %926 = vrot.lane.b32.xlu0 %v683, 48
    %v927 = vpop.permute.xlu0 %926
    %v930 = vsel %vm173, %v925, 0
    %932 = vmatpush.msra.mxu0 0.0
    %933 = vmatpush.msra.mxu0 0.0
    %934 = vmatpush.msra.mxu0 0.0
    %935 = vmatpush.msra.mxu0 0.0
    %936 = vmatpush.msra.mxu0 0.0
    %937 = vmatpush.msra.mxu0 0.0
    %938 = vmatpush.msra.mxu0 0.0
    %939 = vmatpush.msra.mxu0 0.0
    %940 = vmatpush.msra.mxu0 0.0
    %941 = vmatpush.msra.mxu0 0.0
    %942 = vmatpush.msra.mxu0 0.0
    %943 = vmatpush.msra.mxu0 0.0
    %944 = vmatpush.msra.mxu0 0.0
    %945 = vmatpush.msra.mxu0 0.0
    %946 = vmatpush.msra.mxu0 0.0
    %947 = vmatpush.msra.mxu0 %v927
    %948 = vmatmul.f32.gmra.mxu0 %v930
    %v949 = vpop.f32.mrf.mxu0
    %v950 = vadd.f32 0.0, %v949
    %951 = vdwg.mxu0
    %953 = vrot.lane.b32.xlu0 %v950, 16
    %v954 = vpop.permute.xlu0 %953
    %v956 = vsel %vm147, %v885, %v954
    %s957 = scalar_lea.vmem %s4, 32
    %v958 = vld [vmem:[%s957] sm:$0xff]
    %v959 = vld [vmem:[%s957 + $0x8] sm:$0xff]
    %v960 = vld [vmem:[%s957 + $0x10] sm:$0xff]
    %v961 = vld [vmem:[%s957 + $0x18] sm:$0xff]
    %v962 = vperm.slane %v38, 1
    %v964 = vsel %vm45, %v821, 0
    %v967 = vsel %vm45, %v956, 0
    %969 = vmatpush.msra.mxu0 0.0
    %970 = vmatpush.msra.mxu0 0.0
    %971 = vmatpush.msra.mxu0 0.0
    %972 = vmatpush.msra.mxu0 0.0
    %973 = vmatpush.msra.mxu0 0.0
    %974 = vmatpush.msra.mxu0 0.0
    %975 = vmatpush.msra.mxu0 0.0
    %976 = vmatpush.msra.mxu0 0.0
    %977 = vmatpush.msra.mxu0 0.0
    %978 = vmatpush.msra.mxu0 0.0
    %979 = vmatpush.msra.mxu0 0.0
    %980 = vmatpush.msra.mxu0 0.0
    %981 = vmatpush.msra.mxu0 %v961
    %982 = vmatpush.msra.mxu0 %v960
    %983 = vmatpush.msra.mxu0 %v959
    %984 = vmatpush.msra.mxu0 %v958
    %985 = vmatmul.f32.gmra.mxu0 %v964
    %v986 = vpop.f32.mrf.mxu0
    %v987 = vadd.f32 %v962, %v986
    %988 = vmatmul.f32.gmra.mxu0 %v967
    %v989 = vpop.f32.mrf.mxu0
    %v990 = vadd.f32 %v962, %v989
    %991 = vdwg.mxu0
    %v992 = vadd.f32 %v648, %v987
    %v993 = vadd.f32 %v649, %v990
    %v994 = vsel %vm45, %v992, 0.0
    %995 = vadd.xlane.f32.xlu0 %v994
    %v996 = vpop.xlane.xlu0 %995
    %v997 = vsel %vm45, %v993, 0.0
    %998 = vadd.xlane.f32.xlu0 %v997
    %v999 = vpop.xlane.xlu0 %998
    %v1000 = vmul.f32 %v996, %v58
    %v1001 = vmul.f32 %v999, %v58
    %v1002 = vsub.f32 %v992, %v1000
    %v1003 = vsub.f32 %v993, %v1001
    %v1004 = vmul.f32 %v1002, %v1002
    %v1005 = vmul.f32 %v1003, %v1003
    %v1006 = vsel %vm45, %v1004, 0.0
    %1007 = vadd.xlane.f32.xlu0 %v1006
    %v1008 = vpop.xlane.xlu0 %1007
    %v1009 = vsel %vm45, %v1005, 0.0
    %1010 = vadd.xlane.f32.xlu0 %v1009
    %v1011 = vpop.xlane.xlu0 %1010
    %v1012 = vmul.f32 %v1008, %v58
    %v1013 = vmul.f32 %v1011, %v58
    %v1014 = vadd.f32 %v1012, 1e-12
    %v1015 = vadd.f32 %v1013, 1e-12
    %v1016 = vrsqrt.pop %v1014
    %v1017 = vmul.f32 %v1016, %v1014
    %v1018 = vmul.f32 %v1017, %v1016
    %v1019 = vmul.f32 0.5, %v1018
    %v1020 = vsub.f32 1.5, %v1019
    %v1021 = vmul.f32 %v1016, %v1020
    %vm1022 = vweird.f32 %v1014
    %vm1023 = vweird.f32 %v1016
    %vm1024 = vmor %vm1022, %vm1023
    %v1025 = vsel %vm1024, %v1016, %v1021
    %v1026 = vrsqrt.pop %v1015
    %v1027 = vmul.f32 %v1026, %v1015
    %v1028 = vmul.f32 %v1027, %v1026
    %v1029 = vmul.f32 0.5, %v1028
    %v1030 = vsub.f32 1.5, %v1029
    %v1031 = vmul.f32 %v1026, %v1030
    %vm1032 = vweird.f32 %v1015
    %vm1033 = vweird.f32 %v1026
    %vm1034 = vmor %vm1032, %vm1033
    %v1035 = vsel %vm1034, %v1026, %v1031
    %v1036 = vmul.f32 %v1002, %v1025
    %v1037 = vmul.f32 %v1003, %v1035
    %v1038 = vperm.slane %v38, 2
    %v1039 = vmul.f32 %v1036, %v1038
    %v1040 = vmul.f32 %v1037, %v1038
    %v1041 = vperm.slane %v38, 3
    %v1042 = vadd.f32 %v1039, %v1041
    %v1043 = vadd.f32 %v1040, %v1041
    %s1044 = scalar_lea.vmem %s5, 32
    %v1045 = vld [vmem:[%s1044] sm:$0xff]
    %v1046 = vld [vmem:[%s1044 + $0x8] sm:$0xff]
    %v1047 = vld [vmem:[%s1044 + $0x10] sm:$0xff]
    %v1048 = vld [vmem:[%s1044 + $0x18] sm:$0xff]
    %v1049 = vperm.slane %v38, 4
    %v1051 = vsel %vm45, %v1042, 0
    %v1054 = vsel %vm45, %v1043, 0
    %1056 = vmatpush.msra.mxu0 0.0
    %1057 = vmatpush.msra.mxu0 0.0
    %1058 = vmatpush.msra.mxu0 0.0
    %1059 = vmatpush.msra.mxu0 0.0
    %1060 = vmatpush.msra.mxu0 0.0
    %1061 = vmatpush.msra.mxu0 0.0
    %1062 = vmatpush.msra.mxu0 0.0
    %1063 = vmatpush.msra.mxu0 0.0
    %1064 = vmatpush.msra.mxu0 0.0
    %1065 = vmatpush.msra.mxu0 0.0
    %1066 = vmatpush.msra.mxu0 0.0
    %1067 = vmatpush.msra.mxu0 0.0
    %1068 = vmatpush.msra.mxu0 %v1048
    %1069 = vmatpush.msra.mxu0 %v1047
    %1070 = vmatpush.msra.mxu0 %v1046
    %1071 = vmatpush.msra.mxu0 %v1045
    %1072 = vmatmul.f32.gmra.mxu0 %v1051
    %v1073 = vpop.f32.mrf.mxu0
    %v1074 = vadd.f32 %v1049, %v1073
    %1075 = vmatmul.f32.gmra.mxu0 %v1054
    %v1076 = vpop.f32.mrf.mxu0
    %v1077 = vadd.f32 %v1049, %v1076
    %1078 = vdwg.mxu0
    %v1079 = vmul.f32 %v1074, 0.5
    %v1080 = vmul.f32 %v1077, 0.5
    %v1081 = vmul.f32 %v1074, 0.044715
    %v1082 = vmul.f32 %v1077, 0.044715
    %v1083 = vmul.f32 %v1081, %v1074
    %v1084 = vmul.f32 %v1082, %v1077
    %v1085 = vmul.f32 %v1083, %v1074
    %v1086 = vmul.f32 %v1084, %v1077
    %v1087 = vadd.f32 %v1074, %v1085
    %v1088 = vadd.f32 %v1077, %v1086
    %v1089 = vmul.f32 %v1087, 0.7978846
    %v1090 = vmul.f32 %v1088, 0.7978846
    %v1091 = vtanh.pop %v1089
    %v1092 = vtanh.pop %v1090
    %v1093 = vadd.f32 %v1091, 1.0
    %v1094 = vadd.f32 %v1092, 1.0
    %v1095 = vmul.f32 %v1079, %v1093
    %v1096 = vmul.f32 %v1080, %v1094
    %s1097 = scalar_lea.vmem %s6, 64
    %v1098 = vld [vmem:[%s1097] sm:$0xff]
    %v1099 = vld [vmem:[%s1097 + $0x8] sm:$0xff]
    %v1100 = vld [vmem:[%s1097 + $0x10] sm:$0xff]
    %v1101 = vld [vmem:[%s1097 + $0x18] sm:$0xff]
    %v1102 = vld [vmem:[%s1097 + $0x20] sm:$0xff]
    %v1103 = vld [vmem:[%s1097 + $0x28] sm:$0xff]
    %v1104 = vld [vmem:[%s1097 + $0x30] sm:$0xff]
    %v1105 = vld [vmem:[%s1097 + $0x38] sm:$0xff]
    %v1106 = vperm.slane %v38, 5
    %v1108 = vsel %vm568, %v1095, 0
    %v1111 = vsel %vm568, %v1096, 0
    %1113 = vmatpush.msra.mxu0 0.0
    %1114 = vmatpush.msra.mxu0 0.0
    %1115 = vmatpush.msra.mxu0 0.0
    %1116 = vmatpush.msra.mxu0 0.0
    %1117 = vmatpush.msra.mxu0 0.0
    %1118 = vmatpush.msra.mxu0 0.0
    %1119 = vmatpush.msra.mxu0 0.0
    %1120 = vmatpush.msra.mxu0 0.0
    %1121 = vmatpush.msra.mxu0 %v1105
    %1122 = vmatpush.msra.mxu0 %v1104
    %1123 = vmatpush.msra.mxu0 %v1103
    %1124 = vmatpush.msra.mxu0 %v1102
    %1125 = vmatpush.msra.mxu0 %v1101
    %1126 = vmatpush.msra.mxu0 %v1100
    %1127 = vmatpush.msra.mxu0 %v1099
    %1128 = vmatpush.msra.mxu0 %v1098
    %1129 = vmatmul.f32.gmra.mxu0 %v1108
    %v1130 = vpop.f32.mrf.mxu0
    %v1131 = vadd.f32 %v1106, %v1130
    %1132 = vmatmul.f32.gmra.mxu0 %v1111
    %v1133 = vpop.f32.mrf.mxu0
    %v1134 = vadd.f32 %v1106, %v1133
    %1135 = vdwg.mxu0
    %v1136 = vadd.f32 %v1042, %v1131
    %v1137 = vadd.f32 %v1043, %v1134
    %v1138 = vsel %vm45, %v1136, 0.0
    %1139 = vadd.xlane.f32.xlu0 %v1138
    %v1140 = vpop.xlane.xlu0 %1139
    %v1141 = vsel %vm45, %v1137, 0.0
    %1142 = vadd.xlane.f32.xlu0 %v1141
    %v1143 = vpop.xlane.xlu0 %1142
    %v1144 = vmul.f32 %v1140, %v58
    %v1145 = vmul.f32 %v1143, %v58
    %v1146 = vsub.f32 %v1136, %v1144
    %v1147 = vsub.f32 %v1137, %v1145
    %v1148 = vmul.f32 %v1146, %v1146
    %v1149 = vmul.f32 %v1147, %v1147
    %v1150 = vsel %vm45, %v1148, 0.0
    %1151 = vadd.xlane.f32.xlu0 %v1150
    %v1152 = vpop.xlane.xlu0 %1151
    %v1153 = vsel %vm45, %v1149, 0.0
    %1154 = vadd.xlane.f32.xlu0 %v1153
    %v1155 = vpop.xlane.xlu0 %1154
    %v1156 = vmul.f32 %v1152, %v58
    %v1157 = vmul.f32 %v1155, %v58
    %v1158 = vadd.f32 %v1156, 1e-12
    %v1159 = vadd.f32 %v1157, 1e-12
    %v1160 = vrsqrt.pop %v1158
    %v1161 = vmul.f32 %v1160, %v1158
    %v1162 = vmul.f32 %v1161, %v1160
    %v1163 = vmul.f32 0.5, %v1162
    %v1164 = vsub.f32 1.5, %v1163
    %v1165 = vmul.f32 %v1160, %v1164
    %vm1166 = vweird.f32 %v1158
    %vm1167 = vweird.f32 %v1160
    %vm1168 = vmor %vm1166, %vm1167
    %v1169 = vsel %vm1168, %v1160, %v1165
    %v1170 = vrsqrt.pop %v1159
    %v1171 = vmul.f32 %v1170, %v1159
    %v1172 = vmul.f32 %v1171, %v1170
    %v1173 = vmul.f32 0.5, %v1172
    %v1174 = vsub.f32 1.5, %v1173
    %v1175 = vmul.f32 %v1170, %v1174
    %vm1176 = vweird.f32 %v1159
    %vm1177 = vweird.f32 %v1170
    %vm1178 = vmor %vm1176, %vm1177
    %v1179 = vsel %vm1178, %v1170, %v1175
    %v1180 = vmul.f32 %v1146, %v1169
    %v1181 = vmul.f32 %v1147, %v1179
    %v1182 = vperm.slane %v38, 6
    %v1183 = vmul.f32 %v1180, %v1182
    %v1184 = vmul.f32 %v1181, %v1182
    %v1185 = vperm.slane %v38, 7
    %v1186 = vadd.f32 %v1183, %v1185
    %v1187 = vadd.f32 %v1184, %v1185
    %v1188 = vld [vmem:[%s7] sm:$0xff]
    %v1189 = vld [vmem:[%s7 + $0x8] sm:$0xff]
    %v1190 = vld [vmem:[%s7 + $0x10] sm:$0xff]
    %v1191 = vld [vmem:[%s7 + $0x18] sm:$0xff]
    %v1192 = vperm.slane %v36, 2
    %v1194 = vsel %vm45, %v1186, 0
    %v1197 = vsel %vm45, %v1187, 0
    %1199 = vmatpush.msra.mxu0 0.0
    %1200 = vmatpush.msra.mxu0 0.0
    %1201 = vmatpush.msra.mxu0 0.0
    %1202 = vmatpush.msra.mxu0 0.0
    %1203 = vmatpush.msra.mxu0 0.0
    %1204 = vmatpush.msra.mxu0 0.0
    %1205 = vmatpush.msra.mxu0 0.0
    %1206 = vmatpush.msra.mxu0 0.0
    %1207 = vmatpush.msra.mxu0 0.0
    %1208 = vmatpush.msra.mxu0 0.0
    %1209 = vmatpush.msra.mxu0 0.0
    %1210 = vmatpush.msra.mxu0 0.0
    %1211 = vmatpush.msra.mxu0 %v1191
    %1212 = vmatpush.msra.mxu0 %v1190
    %1213 = vmatpush.msra.mxu0 %v1189
    %1214 = vmatpush.msra.mxu0 %v1188
    %1215 = vmatmul.f32.gmra.mxu0 %v1194
    %v1216 = vpop.f32.mrf.mxu0
    %v1217 = vadd.f32 %v1192, %v1216
    %1218 = vmatmul.f32.gmra.mxu0 %v1197
    %v1219 = vpop.f32.mrf.mxu0
    %v1220 = vadd.f32 %v1192, %v1219
    %1221 = vdwg.mxu0
    %v1222 = vmul.f32 %v1217, 0.5
    %v1223 = vmul.f32 %v1220, 0.5
    %v1224 = vmul.f32 %v1217, 0.044715
    %v1225 = vmul.f32 %v1220, 0.044715
    %v1226 = vmul.f32 %v1224, %v1217
    %v1227 = vmul.f32 %v1225, %v1220
    %v1228 = vmul.f32 %v1226, %v1217
    %v1229 = vmul.f32 %v1227, %v1220
    %v1230 = vadd.f32 %v1217, %v1228
    %v1231 = vadd.f32 %v1220, %v1229
    %v1232 = vmul.f32 %v1230, 0.7978846
    %v1233 = vmul.f32 %v1231, 0.7978846
    %v1234 = vtanh.pop %v1232
    %v1235 = vtanh.pop %v1233
    %v1236 = vadd.f32 %v1234, 1.0
    %v1237 = vadd.f32 %v1235, 1.0
    %v1238 = vmul.f32 %v1222, %v1236
    %v1239 = vmul.f32 %v1223, %v1237
    %v1240 = vsel %vm45, %v1238, 0.0
    %1241 = vadd.xlane.f32.xlu0 %v1240
    %v1242 = vpop.xlane.xlu0 %1241
    %v1243 = vsel %vm45, %v1239, 0.0
    %1244 = vadd.xlane.f32.xlu0 %v1243
    %v1245 = vpop.xlane.xlu0 %1244
    %v1246 = vmul.f32 %v1242, %v58
    %v1247 = vmul.f32 %v1245, %v58
    %v1248 = vsub.f32 %v1238, %v1246
    %v1249 = vsub.f32 %v1239, %v1247
    %v1250 = vmul.f32 %v1248, %v1248
    %v1251 = vmul.f32 %v1249, %v1249
    %v1252 = vsel %vm45, %v1250, 0.0
    %1253 = vadd.xlane.f32.xlu0 %v1252
    %v1254 = vpop.xlane.xlu0 %1253
    %v1255 = vsel %vm45, %v1251, 0.0
    %1256 = vadd.xlane.f32.xlu0 %v1255
    %v1257 = vpop.xlane.xlu0 %1256
    %v1258 = vmul.f32 %v1254, %v58
    %v1259 = vmul.f32 %v1257, %v58
    %v1260 = vadd.f32 %v1258, 1e-12
    %v1261 = vadd.f32 %v1259, 1e-12
    %v1262 = vrsqrt.pop %v1260
    %v1263 = vmul.f32 %v1262, %v1260
    %v1264 = vmul.f32 %v1263, %v1262
    %v1265 = vmul.f32 0.5, %v1264
    %v1266 = vsub.f32 1.5, %v1265
    %v1267 = vmul.f32 %v1262, %v1266
    %vm1268 = vweird.f32 %v1260
    %vm1269 = vweird.f32 %v1262
    %vm1270 = vmor %vm1268, %vm1269
    %v1271 = vsel %vm1270, %v1262, %v1267
    %v1272 = vrsqrt.pop %v1261
    %v1273 = vmul.f32 %v1272, %v1261
    %v1274 = vmul.f32 %v1273, %v1272
    %v1275 = vmul.f32 0.5, %v1274
    %v1276 = vsub.f32 1.5, %v1275
    %v1277 = vmul.f32 %v1272, %v1276
    %vm1278 = vweird.f32 %v1261
    %vm1279 = vweird.f32 %v1272
    %vm1280 = vmor %vm1278, %vm1279
    %v1281 = vsel %vm1280, %v1272, %v1277
    %v1282 = vmul.f32 %v1248, %v1271
    %v1283 = vmul.f32 %v1249, %v1281
    %v1284 = vperm.slane %v36, 3
    %v1285 = vmul.f32 %v1282, %v1284
    %v1286 = vmul.f32 %v1283, %v1284
    %v1287 = vperm.slane %v36, 4
    %v1288 = vadd.f32 %v1285, %v1287
    %v1289 = vadd.f32 %v1286, %v1287
    %v1290 = vld [vmem:[%s8] sm:$0xff]
    %v1291 = vld [vmem:[%s8 + $0x8] sm:$0xff]
    %v1292 = vld [vmem:[%s8 + $0x10] sm:$0xff]
    %v1293 = vld [vmem:[%s8 + $0x18] sm:$0xff]
    %v1294 = vld [vmem:[%s8 + $0x20] sm:$0xff]
    %v1295 = vld [vmem:[%s8 + $0x28] sm:$0xff]
    %v1296 = vld [vmem:[%s8 + $0x30] sm:$0xff]
    %v1297 = vld [vmem:[%s8 + $0x38] sm:$0xff]
    %v1298 = vld [vmem:[%s8 + $0x40] sm:$0xff]
    %v1299 = vld [vmem:[%s8 + $0x48] sm:$0xff]
    %v1300 = vld [vmem:[%s8 + $0x50] sm:$0xff]
    %v1301 = vld [vmem:[%s8 + $0x58] sm:$0xff]
    %v1302 = vld [vmem:[%s8 + $0x60] sm:$0xff]
    %v1303 = vld [vmem:[%s8 + $0x68] sm:$0xff]
    %v1304 = vld [vmem:[%s8 + $0x70] sm:$0xff]
    %v1305 = vld [vmem:[%s8 + $0x78] sm:$0xff]
    %v1306 = vperm.slane %v36, 5
    %v1308 = vsel %vm45, %v1288, 0
    %v1311 = vsel %vm45, %v1289, 0
    %v1314 = vsel %vm45, %v1290, 0
    %v1317 = vsel %vm45, %v1291, 0
    %v1320 = vsel %vm45, %v1292, 0
    %v1323 = vsel %vm45, %v1293, 0
    %v1326 = vsel %vm45, %v1294, 0
    %v1329 = vsel %vm45, %v1295, 0
    %v1332 = vsel %vm45, %v1296, 0
    %v1335 = vsel %vm45, %v1297, 0
    %v1338 = vsel %vm45, %v1298, 0
    %v1341 = vsel %vm45, %v1299, 0
    %v1344 = vsel %vm45, %v1300, 0
    %v1347 = vsel %vm45, %v1301, 0
    %v1350 = vsel %vm45, %v1302, 0
    %v1353 = vsel %vm45, %v1303, 0
    %v1356 = vsel %vm45, %v1304, 0
    %v1359 = vsel %vm45, %v1305, 0
    %1361 = vmatpush.xpose.msra.mxu0 %v1359
    %1362 = vmatpush.xpose.msra.mxu0 %v1356
    %1363 = vmatpush.xpose.msra.mxu0 %v1353
    %1364 = vmatpush.xpose.msra.mxu0 %v1350
    %1365 = vmatpush.xpose.msra.mxu0 %v1347
    %1366 = vmatpush.xpose.msra.mxu0 %v1344
    %1367 = vmatpush.xpose.msra.mxu0 %v1341
    %1368 = vmatpush.xpose.msra.mxu0 %v1338
    %1369 = vmatpush.xpose.msra.mxu0 %v1335
    %1370 = vmatpush.xpose.msra.mxu0 %v1332
    %1371 = vmatpush.xpose.msra.mxu0 %v1329
    %1372 = vmatpush.xpose.msra.mxu0 %v1326
    %1373 = vmatpush.xpose.msra.mxu0 %v1323
    %1374 = vmatpush.xpose.msra.mxu0 %v1320
    %1375 = vmatpush.xpose.msra.mxu0 %v1317
    %1376 = vmatpush.xpose.msra.mxu0 %v1314
    %1377 = vmatmul.f32.gmra.mxu0 %v1308
    %v1378 = vpop.f32.mrf.mxu0
    %v1379 = vadd.f32 %v1306, %v1378
    %1380 = vmatmul.f32.gmra.mxu0 %v1311
    %v1381 = vpop.f32.mrf.mxu0
    %v1382 = vadd.f32 %v1306, %v1381
    %1383 = vdwg.mxu0
    %1384 = vst [vmem:[#allocation2] sm:$0xff] %v1379
    %1385 = vst [vmem:[#allocation2 + $0x8] sm:$0xff] %v1382
    %1386 = vmax.xlane.f32.xlu0 %v1379
    %v1387 = vpop.xlane.xlu0 %1386
    %1388 = vmax.xlane.f32.xlu0 %v1382
    %v1389 = vpop.xlane.xlu0 %1388
    %v1390 = vsub.f32 %v1379, %v1387
    %v1391 = vsub.f32 %v1382, %v1389
    %v1392 = vmul.f32 %v1390, 1.442695
    %v1393 = vpow.pop %v1392
    %v1394 = vmul.f32 %v1391, 1.442695
    %v1395 = vpow.pop %v1394
    %1396 = vadd.xlane.f32.xlu0 %v1393
    %v1397 = vpop.xlane.xlu0 %1396
    %1398 = vadd.xlane.f32.xlu0 %v1395
    %v1399 = vpop.xlane.xlu0 %1398
    %v1400 = vlog2.pop %v1397
    %v1401 = vmul.f32 %v1400, 0.6931472
    %v1402 = vlog2.pop %v1399
    %v1403 = vmul.f32 %v1402, 0.6931472
    %v1404 = vadd.f32 %v1387, %v1401
    %v1405 = vadd.f32 %v1389, %v1403
    %v1406 = vmul.f32 %v1379, %v39
    %v1407 = vmul.f32 %v1382, %v40
    %1408 = vadd.xlane.f32.xlu0 %v1406
    %v1409 = vpop.xlane.xlu0 %1408
    %1410 = vadd.xlane.f32.xlu0 %v1407
    %v1411 = vpop.xlane.xlu0 %1410
    %1412 = vadd.xlane.f32.xlu0 %v39
    %v1413 = vpop.xlane.xlu0 %1412
    %1414 = vadd.xlane.f32.xlu0 %v40
    %v1415 = vpop.xlane.xlu0 %1414
    %v1416 = vsub.f32 %v1404, %v1409
    %v1417 = vsub.f32 %v1405, %v1411
    %v1418 = vmul.f32 %v1416, %v1413
    %v1419 = vmul.f32 %v1417, %v1415
    %vm1420 = vcmask 7168
    %v1421 = vsel %vm1420, %v1418, 0.0
    %v1422 = vsel %vm1420, %v1419, 0.0
    %v1423 = vadd.f32 %v1421, %v1422
    %1424 = vadd.xlane.f32.xlu0 %v1423
    %v1425 = vpop.xlane.xlu0 %1424
    %v1426 = vrot.slane %v1425, 4
    %v1427 = vadd.f32 %v1425, %v1426
    %v1428 = vrot.slane %v1427, 2
    %v1429 = vadd.f32 %v1427, %v1428
    %v1430 = vrot.slane %v1429, 1
    %v1431 = vadd.f32 %v1429, %v1430
    %s1432 = vtos %v1431
    %s1433 = scalar_lea.smem [#allocation5], 0
    %1434 = sst [smem:[%s1433]] %s1432
    %v1435 = vsel %vm1420, %v1413, 0.0
    %v1436 = vsel %vm1420, %v1415, 0.0
    %v1437 = vadd.f32 %v1435, %v1436
    %1438 = vadd.xlane.f32.xlu0 %v1437
    %v1439 = vpop.xlane.xlu0 %1438
    %v1440 = vrot.slane %v1439, 4
    %v1441 = vadd.f32 %v1439, %v1440
    %v1442 = vrot.slane %v1441, 2
    %v1443 = vadd.f32 %v1441, %v1442
    %v1444 = vrot.slane %v1443, 1
    %v1445 = vadd.f32 %v1443, %v1444
    %s1446 = vtos %v1445
    %s1447 = scalar_lea.smem [#allocation5], 1
    %1448 = sst [smem:[%s1447]] %s1446
    %v1449 = vperm.slane %v36, 6
    %v1450 = vmul.f32 %v1186, %v1449
    %v1451 = vmul.f32 %v1187, %v1449
    %v1452 = vsel %vm45, %v1450, 0.0
    %1453 = vadd.xlane.f32.xlu0 %v1452
    %v1454 = vpop.xlane.xlu0 %1453
    %v1455 = vsel %vm45, %v1451, 0.0
    %1456 = vadd.xlane.f32.xlu0 %v1455
    %v1457 = vpop.xlane.xlu0 %1456
    %v1458 = vperm.slane %v36, 7
    %v1459 = vadd.f32 %v1454, %v1458
    %v1460 = vadd.f32 %v1457, %v1458
    %v1461 = vsub.f32 0.0, %v1459
    %v1462 = vsub.f32 0.0, %v1460
    %v1463 = vmul.f32 %v1461, 1.442695
    %v1464 = vpow.pop %v1463
    %v1465 = vmul.f32 %v1462, 1.442695
    %v1466 = vpow.pop %v1465
    %v1467 = vadd.f32 %v1464, 1.0
    %v1468 = vadd.f32 %v1466, 1.0
    %v1469 = vrcp.pop %v1467
    %v1470 = vmul.f32 %v1467, %v1469
    %v1471 = vsub.f32 1.0, %v1470
    %v1472 = vmul.f32 %v1469, %v1471
    %v1473 = vadd.f32 %v1469, %v1472
    %vm1474 = vweird.f32 %v1467
    %vm1475 = vweird.f32 %v1469
    %vm1476 = vmor %vm1474, %vm1475
    %v1477 = vsel %vm1476, %v1469, %v1473
    %v1478 = vand.u32 2147483647, %v1467
    %vm1479 = vcmp.eq.f32.partialorder %v1478, 8.507059e+37
    %v1480 = vand.u32 %v1467, 2147483648
    %v1481 = vor.u32 1.1754944e-38, %v1480
    %v1482 = vsel %vm1479, %v1481, %v1477
    %v1483 = vmul.f32 1.0, %v1482
    %v1484 = vrcp.pop %v1468
    %v1485 = vmul.f32 %v1468, %v1484
    %v1486 = vsub.f32 1.0, %v1485
    %v1487 = vmul.f32 %v1484, %v1486
    %v1488 = vadd.f32 %v1484, %v1487
    %vm1489 = vweird.f32 %v1468
    %vm1490 = vweird.f32 %v1484
    %vm1491 = vmor %vm1489, %vm1490
    %v1492 = vsel %vm1491, %v1484, %v1488
    %v1493 = vand.u32 2147483647, %v1468
    %vm1494 = vcmp.eq.f32.partialorder %v1493, 8.507059e+37
    %v1495 = vand.u32 %v1468, 2147483648
    %v1496 = vor.u32 1.1754944e-38, %v1495
    %v1497 = vsel %vm1494, %v1496, %v1492
    %v1498 = vmul.f32 1.0, %v1497
    %v1499 = vmul.f32 %v41, -0.25
    %v1500 = vmul.f32 %v42, -0.25
    %v1501 = vsub.f32 1.0, %v1483
    %v1502 = vsub.f32 1.0, %v1498
    %v1503 = vmul.f32 %v1499, %v1501
    %v1504 = vmul.f32 %v1500, %v1502
    %v1505 = vmul.f32 %v1503, %v1501
    %v1506 = vmul.f32 %v1504, %v1502
    %v1507 = vadd.f32 %v1483, 1e-09
    %v1508 = vadd.f32 %v1498, 1e-09
    %v1509 = vlog2.pop %v1507
    %v1510 = vmul.f32 %v1509, 0.6931472
    %v1511 = vlog2.pop %v1508
    %v1512 = vmul.f32 %v1511, 0.6931472
    %v1513 = vmul.f32 %v1505, %v1510
    %v1514 = vmul.f32 %v1506, %v1512
    %v1515 = vsub.f32 1.0, %v41
    %v1516 = vsub.f32 1.0, %v42
    %v1517 = vmul.f32 %v1515, -0.75
    %v1518 = vmul.f32 %v1516, -0.75
    %v1519 = vmul.f32 %v1517, %v1483
    %v1520 = vmul.f32 %v1518, %v1498
    %v1521 = vmul.f32 %v1519, %v1483
    %v1522 = vmul.f32 %v1520, %v1498
    %v1523 = vadd.f32 %v1501, 1e-09
    %v1524 = vadd.f32 %v1502, 1e-09
    %v1525 = vlog2.pop %v1523
    %v1526 = vmul.f32 %v1525, 0.6931472
    %v1527 = vlog2.pop %v1524
    %v1528 = vmul.f32 %v1527, 0.6931472
    %v1529 = vmul.f32 %v1521, %v1526
    %v1530 = vmul.f32 %v1522, %v1528
    %v1531 = vadd.f32 %v1513, %v1529
    %v1532 = vadd.f32 %v1514, %v1530
    %1535 = vrot.lane.b32.xlu0 %v41, 127
    %v1536 = vpop.permute.xlu0 %1535
    %1537 = vrot.lane.b32.xlu0 %v42, 127
    %v1538 = vpop.permute.xlu0 %1537
    %v1541 = vmul.f32 %v1531, %v1536
    %v1542 = vmul.f32 %v1532, %v1538
    %v1543 = vsel %vm1420, %v1541, 0.0
    %v1544 = vsel %vm1420, %v1542, 0.0
    %v1545 = vadd.f32 %v1543, %v1544
    %1546 = vadd.xlane.f32.xlu0 %v1545
    %v1547 = vpop.xlane.xlu0 %1546
    %v1548 = vrot.slane %v1547, 4
    %v1549 = vadd.f32 %v1547, %v1548
    %v1550 = vrot.slane %v1549, 2
    %v1551 = vadd.f32 %v1549, %v1550
    %v1552 = vrot.slane %v1551, 1
    %v1553 = vadd.f32 %v1551, %v1552
    %s1554 = vtos %v1553
    %s1555 = scalar_lea.smem [#allocation5], 2
    %1556 = sst [smem:[%s1555]] %s1554
    %v1557 = vsel %vm1420, %v1536, 0.0
    %v1558 = vsel %vm1420, %v1538, 0.0
    %v1559 = vadd.f32 %v1557, %v1558
    %1560 = vadd.xlane.f32.xlu0 %v1559
    %v1561 = vpop.xlane.xlu0 %1560
    %v1562 = vrot.slane %v1561, 4
    %v1563 = vadd.f32 %v1561, %v1562
    %v1564 = vrot.slane %v1563, 2
    %v1565 = vadd.f32 %v1563, %v1564
    %v1566 = vrot.slane %v1565, 1
    %v1567 = vadd.f32 %v1565, %v1566
    %s1568 = vtos %v1567
    %s1569 = scalar_lea.smem [#allocation5], 3
    %1570 = sst [smem:[%s1569]] %s1568
    // Predicated region
    $region38: #{bert_mlm_detect_forward.1} parent=1 // pred_check
      _
    $region39: #{bert_mlm_detect_forward.1} parent=1 // pred_check_branch
      %1572 = sbr.rel (0) target = $region41
    $region40: #{bert_mlm_detect_forward.1} parent=1 // pred_region
      %1574 = vsyncadd [#allocation3], 0
      %s1575 = sshll.u32 [#allocation2], 4
      %s1576 = int_to_ptr.vmem [resolvable:$true] %s1575
      %s1577 = sshll.u32 %s9, 4
      %s1578 = int_to_ptr.hbm [resolvable:$true] %s1577
      %1583 = dma.vmem_to_hbm [thread:$0]  %s1576, 256, %s1578, [#allocation3], 128, 128, 8
    $region41: #{bert_mlm_detect_forward.1} parent=1 // pred_fallthru
      _
    // Predicated region
    $region42: #{bert_mlm_detect_forward.1} parent=1 // pred_check
      _
    $region43: #{bert_mlm_detect_forward.1} parent=1 // pred_check_branch
      %1585 = sbr.rel (0) target = $region45
    $region44: #{bert_mlm_detect_forward.1} parent=1 // pred_region
      %1587 = vsyncadd [#allocation4], 0
      %s1589 = sshll.u32 %s10, 4
      %s1590 = int_to_ptr.vmem [resolvable:$true] %s1589
      %1592 = dma.smem_to_vmem [#allocation5], 16, %s1590, [#allocation4]
    $region45: #{bert_mlm_detect_forward.1} parent=1 // pred_fallthru
      _
    // Predicated region
    $region46: #{bert_mlm_detect_forward.1} parent=1 // pred_check
      _
    $region47: #{bert_mlm_detect_forward.1} parent=1 // pred_check_branch
      %1594 = sbr.rel (0) target = $region49
    $region48: #{bert_mlm_detect_forward.1} parent=1 // pred_region
      %1596 = dma.done [#allocation3], 256
    $region49: #{bert_mlm_detect_forward.1} parent=1 // pred_fallthru
      _
    // Predicated region
    $region50: #{bert_mlm_detect_forward.1} parent=1 // pred_check
      _
    $region51: #{bert_mlm_detect_forward.1} parent=1 // pred_check_branch
      %1598 = sbr.rel (0) target = $region53
    $region52: #{bert_mlm_detect_forward.1} parent=1 // pred_region
      %1600 = dma.done [#allocation4], 16
    $region53: #{bert_mlm_detect_forward.1} parent=1 // pred_fallthru
      _
    %1601 = sfence
    %1602 = vsyncpa [#allocation3], 1
    %1603 = vsyncpa [#allocation4], 1

</llo_original>
